<compile_context>
chip_gen: v7x
topology: tpu7x:2x2x1
jax: 0.10.0
libtpu: 0.0.40
codegen_flags: <defaults>
</compile_context>

<pallas_src>
import jax
import jax.numpy as jnp
from jax import lax
from jax.experimental import pallas as pl
from jax.experimental.pallas import tpu as pltpu

TAG_PAD = 128  # pad decoder output lanes to a full vreg width for lane-dense stores


def make_bilstm_kernel(T, B, H):
    B2 = 2 * B

    def kernel(emb_ref, wbig_ref, whh_ref, wdec_ref, bd_ref, out_ref, h_scr):
        # --- Single hoisted input projection for ALL timesteps and BOTH directions.
        #     Biases are folded in via the indicator columns of emb_big; the 'g' gate
        #     columns of every weight are pre-scaled by 2 (tanh(x) = 2*sigmoid(2x) - 1).
        gx = jnp.dot(emb_ref[...], wbig_ref[...],
                     preferred_element_type=jnp.float32)        # (T*2B, 4H), step-interleaved
        whh = whh_ref[...]                                      # (2H, 4H)  [Whh_f^T ; Whh_b^T]

        # --- Hoisted masks (built once, outside the recurrence).
        row = lax.broadcasted_iota(jnp.int32, (B2, 2 * H), 0)
        col = lax.broadcasted_iota(jnp.int32, (B2, 2 * H), 1)
        # fwd rows (r < B) keep cols 0:H, bwd rows keep cols H:2H -> block-diagonal h layout
        blk_mask = ((row < B) == (col < H)).astype(jnp.float32)             # (2B, 2H)
        lane = lax.broadcasted_iota(jnp.int32, (B2, 4 * H), 1)
        is_g = (lane >= 2 * H) & (lane < 3 * H)                             # tanh ('g') lanes

        h_blk = jnp.zeros((B2, 2 * H), jnp.float32)   # block-diag hidden state (2B, 2H)
        c = jnp.zeros((B2, H), jnp.float32)           # cell state, both directions stacked

        # --- Single merged recurrence: step s handles fwd time s and bwd time T-1-s.
        for s in range(T):
            tb = T - 1 - s
            gates = gx[s * B2:(s + 1) * B2, :] + jnp.dot(
                h_blk, whh, preferred_element_type=jnp.float32)             # (2B, 4H)
            # ONE full-vreg EUP pass + one VPU select (g lanes recover tanh exactly).
            act = jax.nn.sigmoid(gates)
            act = jnp.where(is_g, 2.0 * act - 1.0, act)
            i = act[:, 0:H]
            f = act[:, H:2 * H]
            g = act[:, 2 * H:3 * H]
            o = act[:, 3 * H:4 * H]
            c = f * c + i * g
            h = o * jnp.tanh(c)                                             # (2B, H)
            # merged decoder scratch: fwd h -> cols 0:H at row s*B, bwd h -> cols H:2H at tb*B
            h_scr[s * B:(s + 1) * B, 0:H] = h[0:B, :]
            h_scr[tb * B:(tb + 1) * B, H:2 * H] = h[B:B2, :]
            # rebuild block-diagonal hidden layout for the next step's single matmul
            h_blk = jnp.concatenate([h, h], axis=1) * blk_mask

        # --- Single batched, lane-dense decoder matmul, off the serial path.
        out_ref[...] = (jnp.dot(h_scr[...], wdec_ref[...],
                                preferred_element_type=jnp.float32)
                        + bd_ref[...])                                      # (T*B, 128)

    return kernel


def bilstm_forward(x_ids, params):
    B, T = x_ids.shape
    E = params["embedding"].shape[1]
    H = params["whh_f"].shape[1]
    tag = params["wdec"].shape[0]
    B2 = 2 * B

    # --- Pre-scale the 'g' gate columns by 2 so the kernel needs a single sigmoid pass.
    def scale_g(w):
        return w.at[..., 2 * H:3 * H].multiply(2.0)

    wihf_t = scale_g(params["wih_f"].T)                                   # (E, 4H)
    wihb_t = scale_g(params["wih_b"].T)                                   # (E, 4H)
    bf = scale_g(params["b_f"])                                           # (1, 4H)
    bb = scale_g(params["b_b"])                                           # (1, 4H)
    whh_blk_t = scale_g(jnp.concatenate(
        [params["whh_f"].T, params["whh_b"].T], axis=0))                  # (2H, 4H)

    # --- Block slab: rows for step s are [fwd emb @ t=s ; bwd emb @ t=T-1-s]; the two
    #     indicator columns fold the per-direction biases into the same single matmul.
    emb_t = params["embedding"][x_ids.T].astype(jnp.float32)              # (T, B, E) time-major
    slab = jnp.zeros((T, B2, 2 * E + 2), jnp.float32)
    slab = slab.at[:, :B, :E].set(emb_t)
    slab = slab.at[:, B:, E:2 * E].set(emb_t[::-1])
    slab = slab.at[:, :B, 2 * E].set(1.0)
    slab = slab.at[:, B:, 2 * E + 1].set(1.0)
    emb_big = slab.reshape(T * B2, 2 * E + 2)

    w_big = jnp.concatenate([wihf_t, wihb_t, bf, bb], axis=0)             # (2E+2, 4H)

    # --- Single merged decoder weight, tag dim padded to a full vreg lane width.
    wdec_big = jnp.zeros((2 * H, TAG_PAD), jnp.float32).at[:, :tag].set(params["wdec"].T)
    bd = jnp.zeros((1, TAG_PAD), jnp.float32).at[:, :tag].set(params["bdec"])

    vmem = pl.BlockSpec(memory_space=pltpu.MemorySpace.VMEM)
    out_2d = pl.pallas_call(
        make_bilstm_kernel(T, B, H),
        out_shape=jax.ShapeDtypeStruct((T * B, TAG_PAD), jnp.float32),
        in_specs=[vmem] * 5,
        out_specs=vmem,
        scratch_shapes=[pltpu.VMEM((T * B, 2 * H), jnp.float32)],
    )(emb_big, w_big, whh_blk_t, wdec_big, bd)

    out = out_2d.reshape(T, B, TAG_PAD)[:, :, :tag]        # drop lane padding
    return jnp.transpose(out, (1, 0, 2))                   # (B, T, tag) batch-first


def reference_forward(x_ids, params):
    # Pure-JAX reference matching PyTorch nn.LSTM(bidirectional=True) + Linear semantics.
    emb = params["embedding"][x_ids].astype(jnp.float32)      # (B, T, E)
    B, T, _ = emb.shape
    H = params["whh_f"].shape[1]

    def run_dir(wih, whh, b, reverse):
        def step(carry, x_t):
            h, c = carry
            gates = x_t @ wih.T + h @ whh.T + b[0]
            i = jax.nn.sigmoid(gates[:, 0:H])
            f = jax.nn.sigmoid(gates[:, H:2 * H])
            g = jnp.tanh(gates[:, 2 * H:3 * H])
            o = jax.nn.sigmoid(gates[:, 3 * H:4 * H])
            c = f * c + i * g
            h = o * jnp.tanh(c)
            return (h, c), h

        xs = jnp.transpose(emb, (1, 0, 2))
        if reverse:
            xs = xs[::-1]
        _, hs = lax.scan(step, (jnp.zeros((B, H)), jnp.zeros((B, H))), xs)
        if reverse:
            hs = hs[::-1]
        return jnp.transpose(hs, (1, 0, 2))                   # (B, T, H)

    hf = run_dir(params["wih_f"], params["whh_f"], params["b_f"], False)
    hb = run_dir(params["wih_b"], params["whh_b"], params["b_b"], True)
    out = jnp.concatenate([hf, hb], axis=-1) @ params["wdec"].T + params["bdec"][0]
    return out


def init_params(key, vocab_size, E, H, tag):
    ks = jax.random.split(key, 10)
    init_range = 0.1
    stdv = 1.0 / (H ** 0.5)

    def u(k, shape, r):
        return jax.random.uniform(k, shape, jnp.float32, -r, r)

    params = {
        "embedding": u(ks[0], (vocab_size, E), init_range),
        # forward direction LSTM (PyTorch layouts: W_ih (4H,E), W_hh (4H,H), gate order i,f,g,o)
        "wih_f": u(ks[1], (4 * H, E), stdv),
        "whh_f": u(ks[2], (4 * H, H), stdv),
        "b_f": (u(ks[3], (1, 4 * H), stdv) + u(ks[4], (1, 4 * H), stdv)),  # b_ih + b_hh
        # backward direction LSTM
        "wih_b": u(ks[5], (4 * H, E), stdv),
        "whh_b": u(ks[6], (4 * H, H), stdv),
        "b_b": (u(ks[7], (1, 4 * H), stdv) + u(ks[8], (1, 4 * H), stdv)),
        # decoder Linear(2H -> tag), bias zero-initialized as in init_weights()
        "wdec": u(ks[9], (tag, 2 * H), init_range),
        "bdec": jnp.zeros((1, tag), jnp.float32),
    }
    return params


if __name__ == "__main__":
    vocab_size, E, H, tag = 50, 32, 32, 8
    B, T = 2, 8

    key = jax.random.PRNGKey(0)
    kp, kx = jax.random.split(key)
    params = init_params(kp, vocab_size, E, H, tag)
    x_ids = jax.random.randint(kx, (B, T), 0, vocab_size, dtype=jnp.int32)

    out = jax.block_until_ready(bilstm_forward(x_ids, params))
    ref = jax.block_until_ready(reference_forward(x_ids, params))

    assert out.shape == (B, T, tag), out.shape
    assert jnp.allclose(out, ref, atol=1e-4, rtol=1e-4), float(jnp.max(jnp.abs(out - ref)))
    print("KERNEL_OK")
</pallas_src>

<mosaic_0001>
module attributes {stable_mosaic.version = 11 : i64} {
  func.func @kernel(%arg0: memref<32x66xf32, #tpu.memory_space<vmem>>, %arg1: memref<66x128xf32, #tpu.memory_space<vmem>>, %arg2: memref<64x128xf32, #tpu.memory_space<vmem>>, %arg3: memref<64x128xf32, #tpu.memory_space<vmem>>, %arg4: memref<1x128xf32, #tpu.memory_space<vmem>>, %arg5: memref<16x128xf32, #tpu.memory_space<vmem>>, %arg6: memref<16x64xf32, #tpu.memory_space<vmem>>) attributes {dimension_semantics = [], scalar_prefetch = 0 : i64, scratch_operands = 1 : i64, tpu.core_type = #tpu.core_type<tc>} {
    %c0 = arith.constant 0 : index
    %c0_0 = arith.constant 0 : index
    %0 = vector.load %arg0[%c0, %c0_0] : memref<32x66xf32, #tpu.memory_space<vmem>>, vector<32x66xf32>
    %c0_1 = arith.constant 0 : index
    %c0_2 = arith.constant 0 : index
    %1 = vector.load %arg1[%c0_1, %c0_2] : memref<66x128xf32, #tpu.memory_space<vmem>>, vector<66x128xf32>
    %cst = arith.constant dense<0.000000e+00> : vector<32x128xf32>
    %2 = tpu.matmul %0, %1, %cst {dimension_numbers = #tpu.dot_dimension_numbers<[1], [0], [0], [1], [0, 0, 1, 1], [], []>} : vector<32x66xf32>, vector<66x128xf32>, vector<32x128xf32> -> vector<32x128xf32>
    %c0_3 = arith.constant 0 : index
    %c0_4 = arith.constant 0 : index
    %3 = vector.load %arg2[%c0_3, %c0_4] : memref<64x128xf32, #tpu.memory_space<vmem>>, vector<64x128xf32>
    %4 = tpu.iota {dimensions = array<i32: 0>} : vector<4x64xi32>
    %5 = tpu.iota {dimensions = array<i32: 1>} : vector<4x64xi32>
    %c2_i32 = arith.constant 2 : i32
    %6 = vector.broadcast %c2_i32 : i32 to vector<4x64xi32>
    %7 = arith.cmpi slt, %4, %6 : vector<4x64xi32>
    %c32_i32 = arith.constant 32 : i32
    %8 = vector.broadcast %c32_i32 : i32 to vector<4x64xi32>
    %9 = arith.cmpi slt, %5, %8 : vector<4x64xi32>
    %10 = arith.xori %7, %9 : vector<4x64xi1>
    %cst_5 = arith.constant dense<true> : vector<4x64xi1>
    %11 = arith.xori %10, %cst_5 : vector<4x64xi1>
    %12 = arith.extui %11 : vector<4x64xi1> to vector<4x64xi32>
    %13 = arith.sitofp %12 : vector<4x64xi32> to vector<4x64xf32>
    %14 = tpu.iota {dimensions = array<i32: 1>} : vector<4x128xi32>
    %c64_i32 = arith.constant 64 : i32
    %15 = vector.broadcast %c64_i32 : i32 to vector<4x128xi32>
    %16 = arith.cmpi sge, %14, %15 : vector<4x128xi32>
    %c96_i32 = arith.constant 96 : i32
    %17 = vector.broadcast %c96_i32 : i32 to vector<4x128xi32>
    %18 = arith.cmpi slt, %14, %17 : vector<4x128xi32>
    %19 = arith.andi %16, %18 : vector<4x128xi1>
    %cst_6 = arith.constant 0.000000e+00 : f32
    %20 = vector.broadcast %cst_6 : f32 to vector<4x64xf32>
    %cst_7 = arith.constant 0.000000e+00 : f32
    %21 = vector.broadcast %cst_7 : f32 to vector<4x32xf32>
    %22 = vector.extract_strided_slice %2 {offsets = [0, 0], sizes = [4, 128], strides = [1, 1]} : vector<32x128xf32> to vector<4x128xf32>
    %cst_8 = arith.constant dense<0.000000e+00> : vector<4x128xf32>
    %23 = tpu.matmul %20, %3, %cst_8 {dimension_numbers = #tpu.dot_dimension_numbers<[1], [0], [0], [1], [0, 0, 1, 1], [], []>} : vector<4x64xf32>, vector<64x128xf32>, vector<4x128xf32> -> vector<4x128xf32>
    %24 = arith.addf %22, %23 : vector<4x128xf32>
    %25 = arith.negf %24 : vector<4x128xf32>
    %26 = math.exp %25 : vector<4x128xf32>
    %cst_9 = arith.constant 1.000000e+00 : f32
    %27 = vector.broadcast %cst_9 : f32 to vector<4x128xf32>
    %28 = arith.addf %27, %26 : vector<4x128xf32>
    %29 = arith.divf %27, %28 : vector<4x128xf32>
    %cst_10 = arith.constant 2.000000e+00 : f32
    %30 = vector.broadcast %cst_10 : f32 to vector<4x128xf32>
    %31 = arith.mulf %30, %29 : vector<4x128xf32>
    %cst_11 = arith.constant 1.000000e+00 : f32
    %32 = vector.broadcast %cst_11 : f32 to vector<4x128xf32>
    %33 = arith.subf %31, %32 : vector<4x128xf32>
    %34 = arith.select %19, %33, %29 : vector<4x128xi1>, vector<4x128xf32>
    %35 = vector.extract_strided_slice %34 {offsets = [0, 0], sizes = [4, 32], strides = [1, 1]} : vector<4x128xf32> to vector<4x32xf32>
    %36 = vector.extract_strided_slice %34 {offsets = [0, 32], sizes = [4, 32], strides = [1, 1]} : vector<4x128xf32> to vector<4x32xf32>
    %37 = vector.extract_strided_slice %34 {offsets = [0, 64], sizes = [4, 32], strides = [1, 1]} : vector<4x128xf32> to vector<4x32xf32>
    %38 = vector.extract_strided_slice %34 {offsets = [0, 96], sizes = [4, 32], strides = [1, 1]} : vector<4x128xf32> to vector<4x32xf32>
    %39 = arith.mulf %36, %21 : vector<4x32xf32>
    %40 = arith.mulf %35, %37 : vector<4x32xf32>
    %41 = arith.addf %39, %40 : vector<4x32xf32>
    %42 = math.tanh %41 : vector<4x32xf32>
    %43 = arith.mulf %38, %42 : vector<4x32xf32>
    %44 = vector.extract_strided_slice %43 {offsets = [0, 0], sizes = [2, 32], strides = [1, 1]} : vector<4x32xf32> to vector<2x32xf32>
    %c0_12 = arith.constant 0 : index
    %c0_13 = arith.constant 0 : index
    %45 = vector.load %arg6[%c0_12, %c0_13] : memref<16x64xf32, #tpu.memory_space<vmem>>, vector<2x32xf32>
    tpu.vector_store %arg6[%c0_12, %c0_13], %44 {strides = array<i32>} : memref<16x64xf32, #tpu.memory_space<vmem>>, vector<2x32xf32>,
    %46 = vector.extract_strided_slice %43 {offsets = [2, 0], sizes = [2, 32], strides = [1, 1]} : vector<4x32xf32> to vector<2x32xf32>
    %c14 = arith.constant 14 : index
    %c32 = arith.constant 32 : index
    %47 = vector.load %arg6[%c14, %c32] : memref<16x64xf32, #tpu.memory_space<vmem>>, vector<2x32xf32>
    tpu.vector_store %arg6[%c14, %c32], %46 {strides = array<i32>} : memref<16x64xf32, #tpu.memory_space<vmem>>, vector<2x32xf32>,
    %48 = tpu.concatenate %43, %43 in 1 : vector<4x32xf32>, vector<4x32xf32> -> vector<4x64xf32>
    %49 = arith.mulf %48, %13 : vector<4x64xf32>
    %50 = vector.extract_strided_slice %2 {offsets = [4, 0], sizes = [4, 128], strides = [1, 1]} : vector<32x128xf32> to vector<4x128xf32>
    %cst_14 = arith.constant dense<0.000000e+00> : vector<4x128xf32>
    %51 = tpu.matmul %49, %3, %cst_14 {dimension_numbers = #tpu.dot_dimension_numbers<[1], [0], [0], [1], [0, 0, 1, 1], [], []>} : vector<4x64xf32>, vector<64x128xf32>, vector<4x128xf32> -> vector<4x128xf32>
    %52 = arith.addf %50, %51 : vector<4x128xf32>
    %53 = arith.negf %52 : vector<4x128xf32>
    %54 = math.exp %53 : vector<4x128xf32>
    %cst_15 = arith.constant 1.000000e+00 : f32
    %55 = vector.broadcast %cst_15 : f32 to vector<4x128xf32>
    %56 = arith.addf %55, %54 : vector<4x128xf32>
    %57 = arith.divf %55, %56 : vector<4x128xf32>
    %cst_16 = arith.constant 2.000000e+00 : f32
    %58 = vector.broadcast %cst_16 : f32 to vector<4x128xf32>
    %59 = arith.mulf %58, %57 : vector<4x128xf32>
    %cst_17 = arith.constant 1.000000e+00 : f32
    %60 = vector.broadcast %cst_17 : f32 to vector<4x128xf32>
    %61 = arith.subf %59, %60 : vector<4x128xf32>
    %62 = arith.select %19, %61, %57 : vector<4x128xi1>, vector<4x128xf32>
    %63 = vector.extract_strided_slice %62 {offsets = [0, 0], sizes = [4, 32], strides = [1, 1]} : vector<4x128xf32> to vector<4x32xf32>
    %64 = vector.extract_strided_slice %62 {offsets = [0, 32], sizes = [4, 32], strides = [1, 1]} : vector<4x128xf32> to vector<4x32xf32>
    %65 = vector.extract_strided_slice %62 {offsets = [0, 64], sizes = [4, 32], strides = [1, 1]} : vector<4x128xf32> to vector<4x32xf32>
    %66 = vector.extract_strided_slice %62 {offsets = [0, 96], sizes = [4, 32], strides = [1, 1]} : vector<4x128xf32> to vector<4x32xf32>
    %67 = arith.mulf %64, %41 : vector<4x32xf32>
    %68 = arith.mulf %63, %65 : vector<4x32xf32>
    %69 = arith.addf %67, %68 : vector<4x32xf32>
    %70 = math.tanh %69 : vector<4x32xf32>
    %71 = arith.mulf %66, %70 : vector<4x32xf32>
    %72 = vector.extract_strided_slice %71 {offsets = [0, 0], sizes = [2, 32], strides = [1, 1]} : vector<4x32xf32> to vector<2x32xf32>
    %c2 = arith.constant 2 : index
    %c0_18 = arith.constant 0 : index
    %73 = vector.load %arg6[%c2, %c0_18] : memref<16x64xf32, #tpu.memory_space<vmem>>, vector<2x32xf32>
    tpu.vector_store %arg6[%c2, %c0_18], %72 {strides = array<i32>} : memref<16x64xf32, #tpu.memory_space<vmem>>, vector<2x32xf32>,
    %74 = vector.extract_strided_slice %71 {offsets = [2, 0], sizes = [2, 32], strides = [1, 1]} : vector<4x32xf32> to vector<2x32xf32>
    %c12 = arith.constant 12 : index
    %c32_19 = arith.constant 32 : index
    %75 = vector.load %arg6[%c12, %c32_19] : memref<16x64xf32, #tpu.memory_space<vmem>>, vector<2x32xf32>
    tpu.vector_store %arg6[%c12, %c32_19], %74 {strides = array<i32>} : memref<16x64xf32, #tpu.memory_space<vmem>>, vector<2x32xf32>,
    %76 = tpu.concatenate %71, %71 in 1 : vector<4x32xf32>, vector<4x32xf32> -> vector<4x64xf32>
    %77 = arith.mulf %76, %13 : vector<4x64xf32>
    %78 = vector.extract_strided_slice %2 {offsets = [8, 0], sizes = [4, 128], strides = [1, 1]} : vector<32x128xf32> to vector<4x128xf32>
    %cst_20 = arith.constant dense<0.000000e+00> : vector<4x128xf32>
    %79 = tpu.matmul %77, %3, %cst_20 {dimension_numbers = #tpu.dot_dimension_numbers<[1], [0], [0], [1], [0, 0, 1, 1], [], []>} : vector<4x64xf32>, vector<64x128xf32>, vector<4x128xf32> -> vector<4x128xf32>
    %80 = arith.addf %78, %79 : vector<4x128xf32>
    %81 = arith.negf %80 : vector<4x128xf32>
    %82 = math.exp %81 : vector<4x128xf32>
    %cst_21 = arith.constant 1.000000e+00 : f32
    %83 = vector.broadcast %cst_21 : f32 to vector<4x128xf32>
    %84 = arith.addf %83, %82 : vector<4x128xf32>
    %85 = arith.divf %83, %84 : vector<4x128xf32>
    %cst_22 = arith.constant 2.000000e+00 : f32
    %86 = vector.broadcast %cst_22 : f32 to vector<4x128xf32>
    %87 = arith.mulf %86, %85 : vector<4x128xf32>
    %cst_23 = arith.constant 1.000000e+00 : f32
    %88 = vector.broadcast %cst_23 : f32 to vector<4x128xf32>
    %89 = arith.subf %87, %88 : vector<4x128xf32>
    %90 = arith.select %19, %89, %85 : vector<4x128xi1>, vector<4x128xf32>
    %91 = vector.extract_strided_slice %90 {offsets = [0, 0], sizes = [4, 32], strides = [1, 1]} : vector<4x128xf32> to vector<4x32xf32>
    %92 = vector.extract_strided_slice %90 {offsets = [0, 32], sizes = [4, 32], strides = [1, 1]} : vector<4x128xf32> to vector<4x32xf32>
    %93 = vector.extract_strided_slice %90 {offsets = [0, 64], sizes = [4, 32], strides = [1, 1]} : vector<4x128xf32> to vector<4x32xf32>
    %94 = vector.extract_strided_slice %90 {offsets = [0, 96], sizes = [4, 32], strides = [1, 1]} : vector<4x128xf32> to vector<4x32xf32>
    %95 = arith.mulf %92, %69 : vector<4x32xf32>
    %96 = arith.mulf %91, %93 : vector<4x32xf32>
    %97 = arith.addf %95, %96 : vector<4x32xf32>
    %98 = math.tanh %97 : vector<4x32xf32>
    %99 = arith.mulf %94, %98 : vector<4x32xf32>
    %100 = vector.extract_strided_slice %99 {offsets = [0, 0], sizes = [2, 32], strides = [1, 1]} : vector<4x32xf32> to vector<2x32xf32>
    %c4 = arith.constant 4 : index
    %c0_24 = arith.constant 0 : index
    %101 = vector.load %arg6[%c4, %c0_24] : memref<16x64xf32, #tpu.memory_space<vmem>>, vector<2x32xf32>
    tpu.vector_store %arg6[%c4, %c0_24], %100 {strides = array<i32>} : memref<16x64xf32, #tpu.memory_space<vmem>>, vector<2x32xf32>,
    %102 = vector.extract_strided_slice %99 {offsets = [2, 0], sizes = [2, 32], strides = [1, 1]} : vector<4x32xf32> to vector<2x32xf32>
    %c10 = arith.constant 10 : index
    %c32_25 = arith.constant 32 : index
    %103 = vector.load %arg6[%c10, %c32_25] : memref<16x64xf32, #tpu.memory_space<vmem>>, vector<2x32xf32>
    tpu.vector_store %arg6[%c10, %c32_25], %102 {strides = array<i32>} : memref<16x64xf32, #tpu.memory_space<vmem>>, vector<2x32xf32>,
    %104 = tpu.concatenate %99, %99 in 1 : vector<4x32xf32>, vector<4x32xf32> -> vector<4x64xf32>
    %105 = arith.mulf %104, %13 : vector<4x64xf32>
    %106 = vector.extract_strided_slice %2 {offsets = [12, 0], sizes = [4, 128], strides = [1, 1]} : vector<32x128xf32> to vector<4x128xf32>
    %cst_26 = arith.constant dense<0.000000e+00> : vector<4x128xf32>
    %107 = tpu.matmul %105, %3, %cst_26 {dimension_numbers = #tpu.dot_dimension_numbers<[1], [0], [0], [1], [0, 0, 1, 1], [], []>} : vector<4x64xf32>, vector<64x128xf32>, vector<4x128xf32> -> vector<4x128xf32>
    %108 = arith.addf %106, %107 : vector<4x128xf32>
    %109 = arith.negf %108 : vector<4x128xf32>
    %110 = math.exp %109 : vector<4x128xf32>
    %cst_27 = arith.constant 1.000000e+00 : f32
    %111 = vector.broadcast %cst_27 : f32 to vector<4x128xf32>
    %112 = arith.addf %111, %110 : vector<4x128xf32>
    %113 = arith.divf %111, %112 : vector<4x128xf32>
    %cst_28 = arith.constant 2.000000e+00 : f32
    %114 = vector.broadcast %cst_28 : f32 to vector<4x128xf32>
    %115 = arith.mulf %114, %113 : vector<4x128xf32>
    %cst_29 = arith.constant 1.000000e+00 : f32
    %116 = vector.broadcast %cst_29 : f32 to vector<4x128xf32>
    %117 = arith.subf %115, %116 : vector<4x128xf32>
    %118 = arith.select %19, %117, %113 : vector<4x128xi1>, vector<4x128xf32>
    %119 = vector.extract_strided_slice %118 {offsets = [0, 0], sizes = [4, 32], strides = [1, 1]} : vector<4x128xf32> to vector<4x32xf32>
    %120 = vector.extract_strided_slice %118 {offsets = [0, 32], sizes = [4, 32], strides = [1, 1]} : vector<4x128xf32> to vector<4x32xf32>
    %121 = vector.extract_strided_slice %118 {offsets = [0, 64], sizes = [4, 32], strides = [1, 1]} : vector<4x128xf32> to vector<4x32xf32>
    %122 = vector.extract_strided_slice %118 {offsets = [0, 96], sizes = [4, 32], strides = [1, 1]} : vector<4x128xf32> to vector<4x32xf32>
    %123 = arith.mulf %120, %97 : vector<4x32xf32>
    %124 = arith.mulf %119, %121 : vector<4x32xf32>
    %125 = arith.addf %123, %124 : vector<4x32xf32>
    %126 = math.tanh %125 : vector<4x32xf32>
    %127 = arith.mulf %122, %126 : vector<4x32xf32>
    %128 = vector.extract_strided_slice %127 {offsets = [0, 0], sizes = [2, 32], strides = [1, 1]} : vector<4x32xf32> to vector<2x32xf32>
    %c6 = arith.constant 6 : index
    %c0_30 = arith.constant 0 : index
    %129 = vector.load %arg6[%c6, %c0_30] : memref<16x64xf32, #tpu.memory_space<vmem>>, vector<2x32xf32>
    tpu.vector_store %arg6[%c6, %c0_30], %128 {strides = array<i32>} : memref<16x64xf32, #tpu.memory_space<vmem>>, vector<2x32xf32>,
    %130 = vector.extract_strided_slice %127 {offsets = [2, 0], sizes = [2, 32], strides = [1, 1]} : vector<4x32xf32> to vector<2x32xf32>
    %c8 = arith.constant 8 : index
    %c32_31 = arith.constant 32 : index
    %131 = vector.load %arg6[%c8, %c32_31] : memref<16x64xf32, #tpu.memory_space<vmem>>, vector<2x32xf32>
    tpu.vector_store %arg6[%c8, %c32_31], %130 {strides = array<i32>} : memref<16x64xf32, #tpu.memory_space<vmem>>, vector<2x32xf32>,
    %132 = tpu.concatenate %127, %127 in 1 : vector<4x32xf32>, vector<4x32xf32> -> vector<4x64xf32>
    %133 = arith.mulf %132, %13 : vector<4x64xf32>
    %134 = vector.extract_strided_slice %2 {offsets = [16, 0], sizes = [4, 128], strides = [1, 1]} : vector<32x128xf32> to vector<4x128xf32>
    %cst_32 = arith.constant dense<0.000000e+00> : vector<4x128xf32>
    %135 = tpu.matmul %133, %3, %cst_32 {dimension_numbers = #tpu.dot_dimension_numbers<[1], [0], [0], [1], [0, 0, 1, 1], [], []>} : vector<4x64xf32>, vector<64x128xf32>, vector<4x128xf32> -> vector<4x128xf32>
    %136 = arith.addf %134, %135 : vector<4x128xf32>
    %137 = arith.negf %136 : vector<4x128xf32>
    %138 = math.exp %137 : vector<4x128xf32>
    %cst_33 = arith.constant 1.000000e+00 : f32
    %139 = vector.broadcast %cst_33 : f32 to vector<4x128xf32>
    %140 = arith.addf %139, %138 : vector<4x128xf32>
    %141 = arith.divf %139, %140 : vector<4x128xf32>
    %cst_34 = arith.constant 2.000000e+00 : f32
    %142 = vector.broadcast %cst_34 : f32 to vector<4x128xf32>
    %143 = arith.mulf %142, %141 : vector<4x128xf32>
    %cst_35 = arith.constant 1.000000e+00 : f32
    %144 = vector.broadcast %cst_35 : f32 to vector<4x128xf32>
    %145 = arith.subf %143, %144 : vector<4x128xf32>
    %146 = arith.select %19, %145, %141 : vector<4x128xi1>, vector<4x128xf32>
    %147 = vector.extract_strided_slice %146 {offsets = [0, 0], sizes = [4, 32], strides = [1, 1]} : vector<4x128xf32> to vector<4x32xf32>
    %148 = vector.extract_strided_slice %146 {offsets = [0, 32], sizes = [4, 32], strides = [1, 1]} : vector<4x128xf32> to vector<4x32xf32>
    %149 = vector.extract_strided_slice %146 {offsets = [0, 64], sizes = [4, 32], strides = [1, 1]} : vector<4x128xf32> to vector<4x32xf32>
    %150 = vector.extract_strided_slice %146 {offsets = [0, 96], sizes = [4, 32], strides = [1, 1]} : vector<4x128xf32> to vector<4x32xf32>
    %151 = arith.mulf %148, %125 : vector<4x32xf32>
    %152 = arith.mulf %147, %149 : vector<4x32xf32>
    %153 = arith.addf %151, %152 : vector<4x32xf32>
    %154 = math.tanh %153 : vector<4x32xf32>
    %155 = arith.mulf %150, %154 : vector<4x32xf32>
    %156 = vector.extract_strided_slice %155 {offsets = [0, 0], sizes = [2, 32], strides = [1, 1]} : vector<4x32xf32> to vector<2x32xf32>
    %c8_36 = arith.constant 8 : index
    %c0_37 = arith.constant 0 : index
    %157 = vector.load %arg6[%c8_36, %c0_37] : memref<16x64xf32, #tpu.memory_space<vmem>>, vector<2x32xf32>
    tpu.vector_store %arg6[%c8_36, %c0_37], %156 {strides = array<i32>} : memref<16x64xf32, #tpu.memory_space<vmem>>, vector<2x32xf32>,
    %158 = vector.extract_strided_slice %155 {offsets = [2, 0], sizes = [2, 32], strides = [1, 1]} : vector<4x32xf32> to vector<2x32xf32>
    %c6_38 = arith.constant 6 : index
    %c32_39 = arith.constant 32 : index
    %159 = vector.load %arg6[%c6_38, %c32_39] : memref<16x64xf32, #tpu.memory_space<vmem>>, vector<2x32xf32>
    tpu.vector_store %arg6[%c6_38, %c32_39], %158 {strides = array<i32>} : memref<16x64xf32, #tpu.memory_space<vmem>>, vector<2x32xf32>,
    %160 = tpu.concatenate %155, %155 in 1 : vector<4x32xf32>, vector<4x32xf32> -> vector<4x64xf32>
    %161 = arith.mulf %160, %13 : vector<4x64xf32>
    %162 = vector.extract_strided_slice %2 {offsets = [20, 0], sizes = [4, 128], strides = [1, 1]} : vector<32x128xf32> to vector<4x128xf32>
    %cst_40 = arith.constant dense<0.000000e+00> : vector<4x128xf32>
    %163 = tpu.matmul %161, %3, %cst_40 {dimension_numbers = #tpu.dot_dimension_numbers<[1], [0], [0], [1], [0, 0, 1, 1], [], []>} : vector<4x64xf32>, vector<64x128xf32>, vector<4x128xf32> -> vector<4x128xf32>
    %164 = arith.addf %162, %163 : vector<4x128xf32>
    %165 = arith.negf %164 : vector<4x128xf32>
    %166 = math.exp %165 : vector<4x128xf32>
    %cst_41 = arith.constant 1.000000e+00 : f32
    %167 = vector.broadcast %cst_41 : f32 to vector<4x128xf32>
    %168 = arith.addf %167, %166 : vector<4x128xf32>
    %169 = arith.divf %167, %168 : vector<4x128xf32>
    %cst_42 = arith.constant 2.000000e+00 : f32
    %170 = vector.broadcast %cst_42 : f32 to vector<4x128xf32>
    %171 = arith.mulf %170, %169 : vector<4x128xf32>
    %cst_43 = arith.constant 1.000000e+00 : f32
    %172 = vector.broadcast %cst_43 : f32 to vector<4x128xf32>
    %173 = arith.subf %171, %172 : vector<4x128xf32>
    %174 = arith.select %19, %173, %169 : vector<4x128xi1>, vector<4x128xf32>
    %175 = vector.extract_strided_slice %174 {offsets = [0, 0], sizes = [4, 32], strides = [1, 1]} : vector<4x128xf32> to vector<4x32xf32>
    %176 = vector.extract_strided_slice %174 {offsets = [0, 32], sizes = [4, 32], strides = [1, 1]} : vector<4x128xf32> to vector<4x32xf32>
    %177 = vector.extract_strided_slice %174 {offsets = [0, 64], sizes = [4, 32], strides = [1, 1]} : vector<4x128xf32> to vector<4x32xf32>
    %178 = vector.extract_strided_slice %174 {offsets = [0, 96], sizes = [4, 32], strides = [1, 1]} : vector<4x128xf32> to vector<4x32xf32>
    %179 = arith.mulf %176, %153 : vector<4x32xf32>
    %180 = arith.mulf %175, %177 : vector<4x32xf32>
    %181 = arith.addf %179, %180 : vector<4x32xf32>
    %182 = math.tanh %181 : vector<4x32xf32>
    %183 = arith.mulf %178, %182 : vector<4x32xf32>
    %184 = vector.extract_strided_slice %183 {offsets = [0, 0], sizes = [2, 32], strides = [1, 1]} : vector<4x32xf32> to vector<2x32xf32>
    %c10_44 = arith.constant 10 : index
    %c0_45 = arith.constant 0 : index
    %185 = vector.load %arg6[%c10_44, %c0_45] : memref<16x64xf32, #tpu.memory_space<vmem>>, vector<2x32xf32>
    tpu.vector_store %arg6[%c10_44, %c0_45], %184 {strides = array<i32>} : memref<16x64xf32, #tpu.memory_space<vmem>>, vector<2x32xf32>,
    %186 = vector.extract_strided_slice %183 {offsets = [2, 0], sizes = [2, 32], strides = [1, 1]} : vector<4x32xf32> to vector<2x32xf32>
    %c4_46 = arith.constant 4 : index
    %c32_47 = arith.constant 32 : index
    %187 = vector.load %arg6[%c4_46, %c32_47] : memref<16x64xf32, #tpu.memory_space<vmem>>, vector<2x32xf32>
    tpu.vector_store %arg6[%c4_46, %c32_47], %186 {strides = array<i32>} : memref<16x64xf32, #tpu.memory_space<vmem>>, vector<2x32xf32>,
    %188 = tpu.concatenate %183, %183 in 1 : vector<4x32xf32>, vector<4x32xf32> -> vector<4x64xf32>
    %189 = arith.mulf %188, %13 : vector<4x64xf32>
    %190 = vector.extract_strided_slice %2 {offsets = [24, 0], sizes = [4, 128], strides = [1, 1]} : vector<32x128xf32> to vector<4x128xf32>
    %cst_48 = arith.constant dense<0.000000e+00> : vector<4x128xf32>
    %191 = tpu.matmul %189, %3, %cst_48 {dimension_numbers = #tpu.dot_dimension_numbers<[1], [0], [0], [1], [0, 0, 1, 1], [], []>} : vector<4x64xf32>, vector<64x128xf32>, vector<4x128xf32> -> vector<4x128xf32>
    %192 = arith.addf %190, %191 : vector<4x128xf32>
    %193 = arith.negf %192 : vector<4x128xf32>
    %194 = math.exp %193 : vector<4x128xf32>
    %cst_49 = arith.constant 1.000000e+00 : f32
    %195 = vector.broadcast %cst_49 : f32 to vector<4x128xf32>
    %196 = arith.addf %195, %194 : vector<4x128xf32>
    %197 = arith.divf %195, %196 : vector<4x128xf32>
    %cst_50 = arith.constant 2.000000e+00 : f32
    %198 = vector.broadcast %cst_50 : f32 to vector<4x128xf32>
    %199 = arith.mulf %198, %197 : vector<4x128xf32>
    %cst_51 = arith.constant 1.000000e+00 : f32
    %200 = vector.broadcast %cst_51 : f32 to vector<4x128xf32>
    %201 = arith.subf %199, %200 : vector<4x128xf32>
    %202 = arith.select %19, %201, %197 : vector<4x128xi1>, vector<4x128xf32>
    %203 = vector.extract_strided_slice %202 {offsets = [0, 0], sizes = [4, 32], strides = [1, 1]} : vector<4x128xf32> to vector<4x32xf32>
    %204 = vector.extract_strided_slice %202 {offsets = [0, 32], sizes = [4, 32], strides = [1, 1]} : vector<4x128xf32> to vector<4x32xf32>
    %205 = vector.extract_strided_slice %202 {offsets = [0, 64], sizes = [4, 32], strides = [1, 1]} : vector<4x128xf32> to vector<4x32xf32>
    %206 = vector.extract_strided_slice %202 {offsets = [0, 96], sizes = [4, 32], strides = [1, 1]} : vector<4x128xf32> to vector<4x32xf32>
    %207 = arith.mulf %204, %181 : vector<4x32xf32>
    %208 = arith.mulf %203, %205 : vector<4x32xf32>
    %209 = arith.addf %207, %208 : vector<4x32xf32>
    %210 = math.tanh %209 : vector<4x32xf32>
    %211 = arith.mulf %206, %210 : vector<4x32xf32>
    %212 = vector.extract_strided_slice %211 {offsets = [0, 0], sizes = [2, 32], strides = [1, 1]} : vector<4x32xf32> to vector<2x32xf32>
    %c12_52 = arith.constant 12 : index
    %c0_53 = arith.constant 0 : index
    %213 = vector.load %arg6[%c12_52, %c0_53] : memref<16x64xf32, #tpu.memory_space<vmem>>, vector<2x32xf32>
    tpu.vector_store %arg6[%c12_52, %c0_53], %212 {strides = array<i32>} : memref<16x64xf32, #tpu.memory_space<vmem>>, vector<2x32xf32>,
    %214 = vector.extract_strided_slice %211 {offsets = [2, 0], sizes = [2, 32], strides = [1, 1]} : vector<4x32xf32> to vector<2x32xf32>
    %c2_54 = arith.constant 2 : index
    %c32_55 = arith.constant 32 : index
    %215 = vector.load %arg6[%c2_54, %c32_55] : memref<16x64xf32, #tpu.memory_space<vmem>>, vector<2x32xf32>
    tpu.vector_store %arg6[%c2_54, %c32_55], %214 {strides = array<i32>} : memref<16x64xf32, #tpu.memory_space<vmem>>, vector<2x32xf32>,
    %216 = tpu.concatenate %211, %211 in 1 : vector<4x32xf32>, vector<4x32xf32> -> vector<4x64xf32>
    %217 = arith.mulf %216, %13 : vector<4x64xf32>
    %218 = vector.extract_strided_slice %2 {offsets = [28, 0], sizes = [4, 128], strides = [1, 1]} : vector<32x128xf32> to vector<4x128xf32>
    %cst_56 = arith.constant dense<0.000000e+00> : vector<4x128xf32>
    %219 = tpu.matmul %217, %3, %cst_56 {dimension_numbers = #tpu.dot_dimension_numbers<[1], [0], [0], [1], [0, 0, 1, 1], [], []>} : vector<4x64xf32>, vector<64x128xf32>, vector<4x128xf32> -> vector<4x128xf32>
    %220 = arith.addf %218, %219 : vector<4x128xf32>
    %221 = arith.negf %220 : vector<4x128xf32>
    %222 = math.exp %221 : vector<4x128xf32>
    %cst_57 = arith.constant 1.000000e+00 : f32
    %223 = vector.broadcast %cst_57 : f32 to vector<4x128xf32>
    %224 = arith.addf %223, %222 : vector<4x128xf32>
    %225 = arith.divf %223, %224 : vector<4x128xf32>
    %cst_58 = arith.constant 2.000000e+00 : f32
    %226 = vector.broadcast %cst_58 : f32 to vector<4x128xf32>
    %227 = arith.mulf %226, %225 : vector<4x128xf32>
    %cst_59 = arith.constant 1.000000e+00 : f32
    %228 = vector.broadcast %cst_59 : f32 to vector<4x128xf32>
    %229 = arith.subf %227, %228 : vector<4x128xf32>
    %230 = arith.select %19, %229, %225 : vector<4x128xi1>, vector<4x128xf32>
    %231 = vector.extract_strided_slice %230 {offsets = [0, 0], sizes = [4, 32], strides = [1, 1]} : vector<4x128xf32> to vector<4x32xf32>
    %232 = vector.extract_strided_slice %230 {offsets = [0, 32], sizes = [4, 32], strides = [1, 1]} : vector<4x128xf32> to vector<4x32xf32>
    %233 = vector.extract_strided_slice %230 {offsets = [0, 64], sizes = [4, 32], strides = [1, 1]} : vector<4x128xf32> to vector<4x32xf32>
    %234 = vector.extract_strided_slice %230 {offsets = [0, 96], sizes = [4, 32], strides = [1, 1]} : vector<4x128xf32> to vector<4x32xf32>
    %235 = arith.mulf %232, %209 : vector<4x32xf32>
    %236 = arith.mulf %231, %233 : vector<4x32xf32>
    %237 = arith.addf %235, %236 : vector<4x32xf32>
    %238 = math.tanh %237 : vector<4x32xf32>
    %239 = arith.mulf %234, %238 : vector<4x32xf32>
    %240 = vector.extract_strided_slice %239 {offsets = [0, 0], sizes = [2, 32], strides = [1, 1]} : vector<4x32xf32> to vector<2x32xf32>
    %c14_60 = arith.constant 14 : index
    %c0_61 = arith.constant 0 : index
    %241 = vector.load %arg6[%c14_60, %c0_61] : memref<16x64xf32, #tpu.memory_space<vmem>>, vector<2x32xf32>
    tpu.vector_store %arg6[%c14_60, %c0_61], %240 {strides = array<i32>} : memref<16x64xf32, #tpu.memory_space<vmem>>, vector<2x32xf32>,
    %242 = vector.extract_strided_slice %239 {offsets = [2, 0], sizes = [2, 32], strides = [1, 1]} : vector<4x32xf32> to vector<2x32xf32>
    %c0_62 = arith.constant 0 : index
    %c32_63 = arith.constant 32 : index
    %243 = vector.load %arg6[%c0_62, %c32_63] : memref<16x64xf32, #tpu.memory_space<vmem>>, vector<2x32xf32>
    tpu.vector_store %arg6[%c0_62, %c32_63], %242 {strides = array<i32>} : memref<16x64xf32, #tpu.memory_space<vmem>>, vector<2x32xf32>,
    %c0_64 = arith.constant 0 : index
    %c0_65 = arith.constant 0 : index
    %244 = vector.load %arg6[%c0_64, %c0_65] : memref<16x64xf32, #tpu.memory_space<vmem>>, vector<16x64xf32>
    %c0_66 = arith.constant 0 : index
    %c0_67 = arith.constant 0 : index
    %245 = vector.load %arg3[%c0_66, %c0_67] : memref<64x128xf32, #tpu.memory_space<vmem>>, vector<64x128xf32>
    %cst_68 = arith.constant dense<0.000000e+00> : vector<16x128xf32>
    %246 = tpu.matmul %244, %245, %cst_68 {dimension_numbers = #tpu.dot_dimension_numbers<[1], [0], [0], [1], [0, 0, 1, 1], [], []>} : vector<16x64xf32>, vector<64x128xf32>, vector<16x128xf32> -> vector<16x128xf32>
    %c0_69 = arith.constant 0 : index
    %c0_70 = arith.constant 0 : index
    %247 = vector.load %arg4[%c0_69, %c0_70] : memref<1x128xf32, #tpu.memory_space<vmem>>, vector<1x128xf32>
    %248 = vector.broadcast %247 : vector<1x128xf32> to vector<16x128xf32>
    %249 = arith.addf %246, %248 : vector<16x128xf32>
    %c0_71 = arith.constant 0 : index
    %c0_72 = arith.constant 0 : index
    %250 = vector.load %arg5[%c0_71, %c0_72] : memref<16x128xf32, #tpu.memory_space<vmem>>, vector<16x128xf32>
    tpu.vector_store %arg5[%c0_71, %c0_72], %249 {strides = array<i32>} : memref<16x128xf32, #tpu.memory_space<vmem>>, vector<16x128xf32>,
    return
  }
}

</mosaic_0001>

<llo_original>
// kernel: tpu_custom_call.1
$region0: #{tpu_custom_call.1}
  #allocation0 [shape = 'u32[]', space=smem, size = 0x4, offset = 0x4, fixed_abs, tag = 'smem constant byte address 0x4 - core index']
  #allocation1 [shape = 'u32[144,128]{1,0:T(1,128)}', space=vmem, size = 0x12000, scoped, tag = 'internal scratch']
  #allocation2 [shape = 'f32[16,64]{1,0:T(8,128)}', space=vmem, size = 0x2000, scoped, tag = 'scratch operand']
  %s0 = inlined_call_operand.hbm [shape: f32[32,66], index: 0, kind: input, shape index: {}]
  %s1 = inlined_call_operand.hbm [shape: f32[66,128], index: 1, kind: input, shape index: {}]
  %s2 = inlined_call_operand.hbm [shape: f32[64,128], index: 2, kind: input, shape index: {}]
  %s3 = inlined_call_operand.hbm [shape: f32[64,128], index: 3, kind: input, shape index: {}]
  %s4 = inlined_call_operand.vmem [shape: f32[1,128], index: 4, kind: input, shape index: {}]
  %s5 = inlined_call_operand.hbm [shape: f32[16,128], index: 5, kind: output, shape index: {}]
  %s6 = sld [smem:[#allocation0]]
  $region46: #{tpu_custom_call.1} parent=0
    _
  %s8 = ssub.s32 1, %s6
  %s9 = scalar_select 0, %s8, %s6
  $region1: #{tpu_custom_call.1} parent=0
    #allocation3 [shape = 'u8[16384]{0}', space=vmem, size = 0x4000, scoped, tag = 'input window, operand 0, single buffered']
    #allocation4 [shape = 's32[1]{0}', space=sflag, size = 0x4, scoped, tag = 'scoped memory for tpu_custom_call.1']
    #allocation5 [shape = 's32[1]{0}', space=sflag, size = 0x4, scoped, tag = 'scoped memory for tpu_custom_call.1']
    #allocation6 [shape = 'u8[36864]{0}', space=vmem, size = 0x9000, scoped, tag = 'input window, operand 1, single buffered']
    #allocation7 [shape = 's32[1]{0}', space=sflag, size = 0x4, scoped, tag = 'scoped memory for tpu_custom_call.1']
    #allocation8 [shape = 'u8[32768]{0}', space=vmem, size = 0x8000, scoped, tag = 'input window, operand 2, single buffered']
    #allocation9 [shape = 'u8[32768]{0}', space=vmem, size = 0x8000, scoped, tag = 'input window, operand 3, single buffered']
    #allocation10 [shape = 's32[1]{0}', space=sflag, size = 0x4, scoped, tag = 'scoped memory for tpu_custom_call.1']
    #allocation11 [shape = 'u8[8192]{0}', space=vmem, size = 0x2000, scoped, tag = 'output window, operand 0, single buffered']
    %10 = vsyncpa [#allocation4], 0
    %11 = vsyncpa [#allocation7], 0
    %12 = vsyncpa [#allocation10], 0
    %13 = vsyncpa [#allocation5], 0
    // Predicated region
    $region2: #{tpu_custom_call.1} parent=1 // pred_check
      _
    $region3: #{tpu_custom_call.1} parent=1 // pred_check_branch
      %15 = sbr.rel (0) target = $region5
    $region4: #{tpu_custom_call.1} parent=1 // pred_region
      %s17 = ssub.s32 512, 512
      %18 = vsyncadd [#allocation4], %s17
      %s19 = sshll.u32 [#allocation3], 4
      %s20 = int_to_ptr.vmem [resolvable:$true] %s19
      %25 = dma.hbm_to_vmem [thread:$0]  %s0, 512, %s20, [#allocation4], 128, 128, 8
    $region5: #{tpu_custom_call.1} parent=1 // pred_fallthru
      _
    // Predicated region
    $region6: #{tpu_custom_call.1} parent=1 // pred_check
      _
    $region7: #{tpu_custom_call.1} parent=1 // pred_check_branch
      %27 = sbr.rel (0) target = $region9
    $region8: #{tpu_custom_call.1} parent=1 // pred_region
      %s29 = ssub.s32 1152, 1152
      %30 = vsyncadd [#allocation7], %s29
      %s31 = sshll.u32 [#allocation6], 4
      %s32 = int_to_ptr.vmem [resolvable:$true] %s31
      %37 = dma.hbm_to_vmem [thread:$0]  %s1, 1152, %s32, [#allocation7], 128, 128, 8
    $region9: #{tpu_custom_call.1} parent=1 // pred_fallthru
      _
    // Predicated region
    $region10: #{tpu_custom_call.1} parent=1 // pred_check
      _
    $region11: #{tpu_custom_call.1} parent=1 // pred_check_branch
      %39 = sbr.rel (0) target = $region13
    $region12: #{tpu_custom_call.1} parent=1 // pred_region
      %s41 = ssub.s32 1024, 1024
      %42 = vsyncadd [#allocation7], %s41
      %s43 = sshll.u32 [#allocation8], 4
      %s44 = int_to_ptr.vmem [resolvable:$true] %s43
      %49 = dma.hbm_to_vmem [thread:$0]  %s2, 1024, %s44, [#allocation7], 128, 128, 8
    $region13: #{tpu_custom_call.1} parent=1 // pred_fallthru
      _
    // Predicated region
    $region14: #{tpu_custom_call.1} parent=1 // pred_check
      _
    $region15: #{tpu_custom_call.1} parent=1 // pred_check_branch
      %51 = sbr.rel (0) target = $region17
    $region16: #{tpu_custom_call.1} parent=1 // pred_region
      %s53 = ssub.s32 1024, 1024
      %54 = vsyncadd [#allocation10], %s53
      %s55 = sshll.u32 [#allocation9], 4
      %s56 = int_to_ptr.vmem [resolvable:$true] %s55
      %61 = dma.hbm_to_vmem [thread:$0]  %s3, 1024, %s56, [#allocation10], 128, 128, 8
    $region17: #{tpu_custom_call.1} parent=1 // pred_fallthru
      _
    // Predicated region
    $region18: #{tpu_custom_call.1} parent=1 // pred_check
      _
    $region19: #{tpu_custom_call.1} parent=1 // pred_check_branch
      %63 = sbr.rel (0) target = $region21
    $region20: #{tpu_custom_call.1} parent=1 // pred_region
      _
    $region21: #{tpu_custom_call.1} parent=1 // pred_fallthru
      _
    // Predicated region
    $region22: #{tpu_custom_call.1} parent=1 // pred_check
      _
    $region23: #{tpu_custom_call.1} parent=1 // pred_check_branch
      %65 = sbr.rel (0) target = $region25
    $region24: #{tpu_custom_call.1} parent=1 // pred_region
      %66 = dma.done [#allocation4], 512
    $region25: #{tpu_custom_call.1} parent=1 // pred_fallthru
      _
    // Predicated region
    $region26: #{tpu_custom_call.1} parent=1 // pred_check
      _
    $region27: #{tpu_custom_call.1} parent=1 // pred_check_branch
      %68 = sbr.rel (0) target = $region29
    $region28: #{tpu_custom_call.1} parent=1 // pred_region
      %69 = dma.done [#allocation7], 1152
    $region29: #{tpu_custom_call.1} parent=1 // pred_fallthru
      _
    // Predicated region
    $region30: #{tpu_custom_call.1} parent=1 // pred_check
      _
    $region31: #{tpu_custom_call.1} parent=1 // pred_check_branch
      %71 = sbr.rel (0) target = $region33
    $region32: #{tpu_custom_call.1} parent=1 // pred_region
      %72 = dma.done [#allocation7], 1024
    $region33: #{tpu_custom_call.1} parent=1 // pred_fallthru
      _
    // Predicated region
    $region34: #{tpu_custom_call.1} parent=1 // pred_check
      _
    $region35: #{tpu_custom_call.1} parent=1 // pred_check_branch
      %74 = sbr.rel (0) target = $region37
    $region36: #{tpu_custom_call.1} parent=1 // pred_region
      %75 = dma.done [#allocation10], 1024
    $region37: #{tpu_custom_call.1} parent=1 // pred_fallthru
      _
    %v76 = vld [vmem:[#allocation3] sm:$0xff]
    %v77 = vld [vmem:[#allocation3 + $0x8] sm:$0xff]
    %v78 = vld [vmem:[#allocation3 + $0x10] sm:$0xff]
    %v79 = vld [vmem:[#allocation3 + $0x18] sm:$0xff]
    %v80 = vld [vmem:[#allocation6] sm:$0xff]
    %v81 = vld [vmem:[#allocation6 + $0x8] sm:$0xff]
    %v82 = vld [vmem:[#allocation6 + $0x10] sm:$0xff]
    %v83 = vld [vmem:[#allocation6 + $0x18] sm:$0xff]
    %v84 = vld [vmem:[#allocation6 + $0x20] sm:$0xff]
    %v85 = vld [vmem:[#allocation6 + $0x28] sm:$0xff]
    %v86 = vld [vmem:[#allocation6 + $0x30] sm:$0xff]
    %v87 = vld [vmem:[#allocation6 + $0x38] sm:$0xff]
    %v88 = vld [vmem:[#allocation6 + $0x40] sm:$0x3]
    %vm89 = vcmask 539648
    %v91 = vsel %vm89, %v76, 0
    %v94 = vsel %vm89, %v77, 0
    %v97 = vsel %vm89, %v78, 0
    %v100 = vsel %vm89, %v79, 0
    %vm102 = vcmask 1041408
    %v104 = vsel %vm102, %v88, 0
    %106 = vmatprep.subr.mxu0 0.0
    %107 = vmatpush1.msra.mxu0 %v80
    %108 = vmatprep.subr.mxu0 0.0
    %109 = vmatpush1.msra.mxu0 %v81
    %110 = vmatprep.subr.mxu0 0.0
    %111 = vmatpush1.msra.mxu0 %v82
    %112 = vmatprep.subr.mxu0 0.0
    %113 = vmatpush1.msra.mxu0 %v83
    %114 = vmatprep.subr.mxu0 0.0
    %115 = vmatpush1.msra.mxu0 %v84
    %116 = vmatprep.subr.mxu0 0.0
    %117 = vmatpush1.msra.mxu0 %v85
    %118 = vmatprep.subr.mxu0 0.0
    %119 = vmatpush1.msra.mxu0 %v86
    %120 = vmatprep.subr.mxu0 0.0
    %121 = vmatpush1.msra.mxu0 %v87
    %122 = vmatprep.subr.mxu0 0.0
    %123 = vmatpush1.msra.mxu0 %v104
    %124 = vmatprep.subr.mxu0 0.0
    %125 = vmatpush1.msra.mxu0 0.0
    %126 = vmatprep.subr.mxu0 0.0
    %127 = vmatpush1.msra.mxu0 0.0
    %128 = vmatprep.subr.mxu0 0.0
    %129 = vmatpush1.msra.mxu0 0.0
    %130 = vmatprep.subr.mxu0 0.0
    %131 = vmatpush1.msra.mxu0 0.0
    %132 = vmatprep.subr.mxu0 0.0
    %133 = vmatpush1.msra.mxu0 0.0
    %134 = vmatprep.subr.mxu0 0.0
    %135 = vmatpush1.msra.mxu0 0.0
    %136 = vmatprep.subr.mxu0 0.0
    %137 = vmatpush1.msra.mxu0 0.0
    %138 = vmatprep.subr.mxu0 0.0
    %139 = vmatpush1.msra.mxu0 0.0
    %140 = vmatprep.subr.mxu0 0.0
    %141 = vmatpush1.msra.mxu0 0.0
    %142 = vmatprep.subr.mxu0 0.0
    %143 = vmatpush1.msra.mxu0 0.0
    %144 = vmatprep.subr.mxu0 0.0
    %145 = vmatpush1.msra.mxu0 0.0
    %146 = vmatprep.subr.mxu0 0.0
    %147 = vmatpush1.msra.mxu0 0.0
    %148 = vmatprep.subr.mxu0 0.0
    %149 = vmatpush1.msra.mxu0 0.0
    %150 = vmatprep.subr.mxu0 0.0
    %151 = vmatpush1.msra.mxu0 0.0
    %152 = vmatprep.subr.mxu0 0.0
    %153 = vmatpush1.msra.mxu0 0.0
    %154 = vmatprep.subr.mxu0 0.0
    %155 = vmatpush1.msra.mxu0 0.0
    %156 = vmatprep.subr.mxu0 0.0
    %157 = vmatpush1.msra.mxu0 0.0
    %158 = vmatprep.subr.mxu0 0.0
    %159 = vmatpush1.msra.mxu0 0.0
    %160 = vmatprep.subr.mxu0 0.0
    %161 = vmatpush1.msra.mxu0 0.0
    %162 = vmatprep.subr.mxu0 0.0
    %163 = vmatpush1.msra.mxu0 0.0
    %164 = vmatprep.subr.mxu0 0.0
    %165 = vmatpush1.msra.mxu0 0.0
    %166 = vmatprep.subr.mxu0 0.0
    %167 = vmatpush1.msra.mxu0 0.0
    %168 = vmatprep.subr.mxu0 0.0
    %169 = vmatpush1.msra.mxu0 0.0
    %170 = vmatprep.mubr.f32.mxu0 0.0
    %171 = vmatmul.mubr.f32.gmra.mrb[0].mxu0 %v91
    %v172 = vpop.f32.mrb[0].mxu0
    %v173 = vadd.f32 0.0, %v172
    %v174 = vpop.f32.mrb[0].mxu0
    %175 = vmatprep.mubr.f32.mxu0 0.0
    %176 = vmatmul.mubr.f32.gmra.mrb[0].mxu0 %v94
    %v177 = vpop.f32.mrb[0].mxu0
    %v178 = vadd.f32 0.0, %v177
    %v179 = vpop.f32.mrb[0].mxu0
    %180 = vmatprep.mubr.f32.mxu0 0.0
    %181 = vmatmul.mubr.f32.gmra.mrb[0].mxu0 %v97
    %v182 = vpop.f32.mrb[0].mxu0
    %v183 = vadd.f32 0.0, %v182
    %v184 = vpop.f32.mrb[0].mxu0
    %185 = vmatprep.mubr.f32.mxu0 0.0
    %186 = vmatmul.mubr.f32.gmra.mrb[0].mxu0 %v100
    %v187 = vpop.f32.mrb[0].mxu0
    %v188 = vadd.f32 0.0, %v187
    %v189 = vpop.f32.mrb[0].mxu0
    %190 = vdwg.mxu0
    %v191 = vld [vmem:[#allocation8] sm:$0xff]
    %v192 = vld [vmem:[#allocation8 + $0x8] sm:$0xff]
    %v193 = vld [vmem:[#allocation8 + $0x10] sm:$0xff]
    %v194 = vld [vmem:[#allocation8 + $0x18] sm:$0xff]
    %v195 = vld [vmem:[#allocation8 + $0x20] sm:$0xff]
    %v196 = vld [vmem:[#allocation8 + $0x28] sm:$0xff]
    %v197 = vld [vmem:[#allocation8 + $0x30] sm:$0xff]
    %v198 = vld [vmem:[#allocation8 + $0x38] sm:$0xff]
    %v199 = vlaneseq
    %v200 = vshrl.u32 %v199, 7
    %v201 = vlaneseq
    %v202 = vand.u32 %v201, 127
    %vm203 = vcmp.lt.s32.totalorder %v200, 2
    %vm204 = vcmp.lt.s32.totalorder %v202, 32
    %vm205 = vmxor %vm203, %vm204
    %vm206 = vmxor %vm205, 1
    %v207 = vsel %vm206, 1, 0
    %v208 = vcvt.s32.f32 %v207
    %vm209 = vcmp.ge.s32.totalorder %v202, 64
    %vm210 = vcmp.lt.s32.totalorder %v202, 96
    %vm211 = vmand %vm209, %vm210
    %vm212 = vcmask 523264
    %v214 = vsel %vm212, 0.0, 0
    %216 = vmatprep.subr.mxu0 0.0
    %217 = vmatpush1.msra.mxu0 %v191
    %218 = vmatprep.subr.mxu0 0.0
    %219 = vmatpush1.msra.mxu0 %v192
    %220 = vmatprep.subr.mxu0 0.0
    %221 = vmatpush1.msra.mxu0 %v193
    %222 = vmatprep.subr.mxu0 0.0
    %223 = vmatpush1.msra.mxu0 %v194
    %224 = vmatprep.subr.mxu0 0.0
    %225 = vmatpush1.msra.mxu0 %v195
    %226 = vmatprep.subr.mxu0 0.0
    %227 = vmatpush1.msra.mxu0 %v196
    %228 = vmatprep.subr.mxu0 0.0
    %229 = vmatpush1.msra.mxu0 %v197
    %230 = vmatprep.subr.mxu0 0.0
    %231 = vmatpush1.msra.mxu0 %v198
    %232 = vmatprep.subr.mxu0 0.0
    %233 = vmatpush1.msra.mxu0 0.0
    %234 = vmatprep.subr.mxu0 0.0
    %235 = vmatpush1.msra.mxu0 0.0
    %236 = vmatprep.subr.mxu0 0.0
    %237 = vmatpush1.msra.mxu0 0.0
    %238 = vmatprep.subr.mxu0 0.0
    %239 = vmatpush1.msra.mxu0 0.0
    %240 = vmatprep.subr.mxu0 0.0
    %241 = vmatpush1.msra.mxu0 0.0
    %242 = vmatprep.subr.mxu0 0.0
    %243 = vmatpush1.msra.mxu0 0.0
    %244 = vmatprep.subr.mxu0 0.0
    %245 = vmatpush1.msra.mxu0 0.0
    %246 = vmatprep.subr.mxu0 0.0
    %247 = vmatpush1.msra.mxu0 0.0
    %248 = vmatprep.subr.mxu0 0.0
    %249 = vmatpush1.msra.mxu0 0.0
    %250 = vmatprep.subr.mxu0 0.0
    %251 = vmatpush1.msra.mxu0 0.0
    %252 = vmatprep.subr.mxu0 0.0
    %253 = vmatpush1.msra.mxu0 0.0
    %254 = vmatprep.subr.mxu0 0.0
    %255 = vmatpush1.msra.mxu0 0.0
    %256 = vmatprep.subr.mxu0 0.0
    %257 = vmatpush1.msra.mxu0 0.0
    %258 = vmatprep.subr.mxu0 0.0
    %259 = vmatpush1.msra.mxu0 0.0
    %260 = vmatprep.subr.mxu0 0.0
    %261 = vmatpush1.msra.mxu0 0.0
    %262 = vmatprep.subr.mxu0 0.0
    %263 = vmatpush1.msra.mxu0 0.0
    %264 = vmatprep.subr.mxu0 0.0
    %265 = vmatpush1.msra.mxu0 0.0
    %266 = vmatprep.subr.mxu0 0.0
    %267 = vmatpush1.msra.mxu0 0.0
    %268 = vmatprep.subr.mxu0 0.0
    %269 = vmatpush1.msra.mxu0 0.0
    %270 = vmatprep.subr.mxu0 0.0
    %271 = vmatpush1.msra.mxu0 0.0
    %272 = vmatprep.subr.mxu0 0.0
    %273 = vmatpush1.msra.mxu0 0.0
    %274 = vmatprep.subr.mxu0 0.0
    %275 = vmatpush1.msra.mxu0 0.0
    %276 = vmatprep.subr.mxu0 0.0
    %277 = vmatpush1.msra.mxu0 0.0
    %278 = vmatprep.subr.mxu0 0.0
    %279 = vmatpush1.msra.mxu0 0.0
    %280 = vmatprep.mubr.f32.mxu0 0.0
    %281 = vmatmul.mubr.f32.gmra.mrb[0].mxu0 %v214
    %v282 = vpop.f32.mrb[0].mxu0
    %v283 = vadd.f32 0.0, %v282
    %v284 = vpop.f32.mrb[0].mxu0
    %285 = vdwg.mxu0
    %v286 = vadd.f32 %v173, %v283
    %v287 = vxor.u32 %v286, 2147483648
    %v288 = vmul.f32 %v287, 1.442695
    %v289 = vpow.pop %v288
    %v290 = vadd.f32 %v289, 1.0
    %v291 = vrcp.pop %v290
    %v292 = vmul.f32 1.0, %v291
    %v293 = vmul.f32 %v292, 2.0
    %v294 = vsub.f32 %v293, 1.0
    %v295 = vsel %vm211, %v294, %v292
    %v296 = vmul.f32 %v295, 0.0
    %298 = vrot.lane.b32.xlu0 %v295, 64
    %v299 = vpop.permute.xlu0 %298
    %v301 = vmul.f32 %v295, %v299
    %303 = vrot.lane.b32.xlu0 %v301, 32
    %v304 = vpop.permute.xlu0 %303
    %v306 = vadd.f32 %v296, %v304
    %v307 = vtanh.pop %v306
    %309 = vrot.lane.b32.xlu0 %v307, 64
    %v310 = vpop.permute.xlu0 %309
    %v312 = vmul.f32 %v295, %v310
    %314 = vrot.lane.b32.xlu0 %v312, 32
    %v315 = vpop.permute.xlu0 %314
    %vm317 = vcmask 254976
    %318 = vst.msk [vmem:[#allocation2] sm:$0x3] %vm317, %v315
    %319 = vrot.lane.b32.xlu0 %v312, 64
    %v320 = vpop.permute.xlu0 %319
    %vm322 = vcmask 519426
    %323 = vst.msk [vmem:[#allocation2 + $0xc] sm:$0xc] %vm322, %v320
    %vm324 = vcmask 261120
    %v325 = vsel %vm324, %v315, %v320
    %v326 = vmul.f32 %v325, %v208
    %v328 = vsel %vm212, %v326, 0
    %330 = vmatprep.subr.mxu0 0.0
    %331 = vmatpush1.msra.mxu0 %v191
    %332 = vmatprep.subr.mxu0 0.0
    %333 = vmatpush1.msra.mxu0 %v192
    %334 = vmatprep.subr.mxu0 0.0
    %335 = vmatpush1.msra.mxu0 %v193
    %336 = vmatprep.subr.mxu0 0.0
    %337 = vmatpush1.msra.mxu0 %v194
    %338 = vmatprep.subr.mxu0 0.0
    %339 = vmatpush1.msra.mxu0 %v195
    %340 = vmatprep.subr.mxu0 0.0
    %341 = vmatpush1.msra.mxu0 %v196
    %342 = vmatprep.subr.mxu0 0.0
    %343 = vmatpush1.msra.mxu0 %v197
    %344 = vmatprep.subr.mxu0 0.0
    %345 = vmatpush1.msra.mxu0 %v198
    %346 = vmatprep.subr.mxu0 0.0
    %347 = vmatpush1.msra.mxu0 0.0
    %348 = vmatprep.subr.mxu0 0.0
    %349 = vmatpush1.msra.mxu0 0.0
    %350 = vmatprep.subr.mxu0 0.0
    %351 = vmatpush1.msra.mxu0 0.0
    %352 = vmatprep.subr.mxu0 0.0
    %353 = vmatpush1.msra.mxu0 0.0
    %354 = vmatprep.subr.mxu0 0.0
    %355 = vmatpush1.msra.mxu0 0.0
    %356 = vmatprep.subr.mxu0 0.0
    %357 = vmatpush1.msra.mxu0 0.0
    %358 = vmatprep.subr.mxu0 0.0
    %359 = vmatpush1.msra.mxu0 0.0
    %360 = vmatprep.subr.mxu0 0.0
    %361 = vmatpush1.msra.mxu0 0.0
    %362 = vmatprep.subr.mxu0 0.0
    %363 = vmatpush1.msra.mxu0 0.0
    %364 = vmatprep.subr.mxu0 0.0
    %365 = vmatpush1.msra.mxu0 0.0
    %366 = vmatprep.subr.mxu0 0.0
    %367 = vmatpush1.msra.mxu0 0.0
    %368 = vmatprep.subr.mxu0 0.0
    %369 = vmatpush1.msra.mxu0 0.0
    %370 = vmatprep.subr.mxu0 0.0
    %371 = vmatpush1.msra.mxu0 0.0
    %372 = vmatprep.subr.mxu0 0.0
    %373 = vmatpush1.msra.mxu0 0.0
    %374 = vmatprep.subr.mxu0 0.0
    %375 = vmatpush1.msra.mxu0 0.0
    %376 = vmatprep.subr.mxu0 0.0
    %377 = vmatpush1.msra.mxu0 0.0
    %378 = vmatprep.subr.mxu0 0.0
    %379 = vmatpush1.msra.mxu0 0.0
    %380 = vmatprep.subr.mxu0 0.0
    %381 = vmatpush1.msra.mxu0 0.0
    %382 = vmatprep.subr.mxu0 0.0
    %383 = vmatpush1.msra.mxu0 0.0
    %384 = vmatprep.subr.mxu0 0.0
    %385 = vmatpush1.msra.mxu0 0.0
    %386 = vmatprep.subr.mxu0 0.0
    %387 = vmatpush1.msra.mxu0 0.0
    %388 = vmatprep.subr.mxu0 0.0
    %389 = vmatpush1.msra.mxu0 0.0
    %390 = vmatprep.subr.mxu0 0.0
    %391 = vmatpush1.msra.mxu0 0.0
    %392 = vmatprep.subr.mxu0 0.0
    %393 = vmatpush1.msra.mxu0 0.0
    %394 = vmatprep.mubr.f32.mxu0 0.0
    %395 = vmatmul.mubr.f32.gmra.mrb[0].mxu0 %v328
    %v396 = vpop.f32.mrb[0].mxu0
    %v397 = vadd.f32 0.0, %v396
    %v398 = vpop.f32.mrb[0].mxu0
    %399 = vdwg.mxu0
    %v401 = vrot.slane %v397, 4
    %v403 = vadd.f32 %v173, %v401
    %v404 = vxor.u32 %v403, 2147483648
    %v405 = vmul.f32 %v404, 1.442695
    %v406 = vpow.pop %v405
    %v407 = vadd.f32 %v406, 1.0
    %v408 = vrcp.pop %v407
    %v409 = vmul.f32 1.0, %v408
    %v410 = vmul.f32 %v409, 2.0
    %v411 = vsub.f32 %v410, 1.0
    %v412 = vsel %vm211, %v411, %v409
    %v414 = vrot.slane %v306, 4
    %v416 = vmul.f32 %v412, %v414
    %418 = vrot.lane.b32.xlu0 %v412, 64
    %v419 = vpop.permute.xlu0 %418
    %v421 = vmul.f32 %v412, %v419
    %423 = vrot.lane.b32.xlu0 %v421, 32
    %v424 = vpop.permute.xlu0 %423
    %v426 = vadd.f32 %v416, %v424
    %v427 = vtanh.pop %v426
    %429 = vrot.lane.b32.xlu0 %v427, 64
    %v430 = vpop.permute.xlu0 %429
    %v432 = vmul.f32 %v412, %v430
    %434 = vrot.lane.b32.xlu0 %v432, 32
    %v435 = vpop.permute.xlu0 %434
    %vm437 = vcmask 259076
    %438 = vst.msk [vmem:[#allocation2 - $0x2] sm:$0x30] %vm437, %v435
    %439 = vrot.lane.b32.xlu0 %v432, 64
    %v440 = vpop.permute.xlu0 %439
    %vm442 = vcmask 523526
    %443 = vst.msk [vmem:[#allocation2 + $0x6] sm:$0xc0] %vm442, %v440
    %v444 = vsel %vm324, %v435, %v440
    %v446 = vrot.slane %v208, 4
    %v448 = vmul.f32 %v444, %v446
    %v450 = vrot.slane %v448, 4
    %v451 = vsel %vm212, %v450, 0
    %453 = vmatprep.subr.mxu0 0.0
    %454 = vmatpush1.msra.mxu0 %v191
    %455 = vmatprep.subr.mxu0 0.0
    %456 = vmatpush1.msra.mxu0 %v192
    %457 = vmatprep.subr.mxu0 0.0
    %458 = vmatpush1.msra.mxu0 %v193
    %459 = vmatprep.subr.mxu0 0.0
    %460 = vmatpush1.msra.mxu0 %v194
    %461 = vmatprep.subr.mxu0 0.0
    %462 = vmatpush1.msra.mxu0 %v195
    %463 = vmatprep.subr.mxu0 0.0
    %464 = vmatpush1.msra.mxu0 %v196
    %465 = vmatprep.subr.mxu0 0.0
    %466 = vmatpush1.msra.mxu0 %v197
    %467 = vmatprep.subr.mxu0 0.0
    %468 = vmatpush1.msra.mxu0 %v198
    %469 = vmatprep.subr.mxu0 0.0
    %470 = vmatpush1.msra.mxu0 0.0
    %471 = vmatprep.subr.mxu0 0.0
    %472 = vmatpush1.msra.mxu0 0.0
    %473 = vmatprep.subr.mxu0 0.0
    %474 = vmatpush1.msra.mxu0 0.0
    %475 = vmatprep.subr.mxu0 0.0
    %476 = vmatpush1.msra.mxu0 0.0
    %477 = vmatprep.subr.mxu0 0.0
    %478 = vmatpush1.msra.mxu0 0.0
    %479 = vmatprep.subr.mxu0 0.0
    %480 = vmatpush1.msra.mxu0 0.0
    %481 = vmatprep.subr.mxu0 0.0
    %482 = vmatpush1.msra.mxu0 0.0
    %483 = vmatprep.subr.mxu0 0.0
    %484 = vmatpush1.msra.mxu0 0.0
    %485 = vmatprep.subr.mxu0 0.0
    %486 = vmatpush1.msra.mxu0 0.0
    %487 = vmatprep.subr.mxu0 0.0
    %488 = vmatpush1.msra.mxu0 0.0
    %489 = vmatprep.subr.mxu0 0.0
    %490 = vmatpush1.msra.mxu0 0.0
    %491 = vmatprep.subr.mxu0 0.0
    %492 = vmatpush1.msra.mxu0 0.0
    %493 = vmatprep.subr.mxu0 0.0
    %494 = vmatpush1.msra.mxu0 0.0
    %495 = vmatprep.subr.mxu0 0.0
    %496 = vmatpush1.msra.mxu0 0.0
    %497 = vmatprep.subr.mxu0 0.0
    %498 = vmatpush1.msra.mxu0 0.0
    %499 = vmatprep.subr.mxu0 0.0
    %500 = vmatpush1.msra.mxu0 0.0
    %501 = vmatprep.subr.mxu0 0.0
    %502 = vmatpush1.msra.mxu0 0.0
    %503 = vmatprep.subr.mxu0 0.0
    %504 = vmatpush1.msra.mxu0 0.0
    %505 = vmatprep.subr.mxu0 0.0
    %506 = vmatpush1.msra.mxu0 0.0
    %507 = vmatprep.subr.mxu0 0.0
    %508 = vmatpush1.msra.mxu0 0.0
    %509 = vmatprep.subr.mxu0 0.0
    %510 = vmatpush1.msra.mxu0 0.0
    %511 = vmatprep.subr.mxu0 0.0
    %512 = vmatpush1.msra.mxu0 0.0
    %513 = vmatprep.subr.mxu0 0.0
    %514 = vmatpush1.msra.mxu0 0.0
    %515 = vmatprep.subr.mxu0 0.0
    %516 = vmatpush1.msra.mxu0 0.0
    %517 = vmatprep.mubr.f32.mxu0 0.0
    %518 = vmatmul.mubr.f32.gmra.mrb[0].mxu0 %v451
    %v519 = vpop.f32.mrb[0].mxu0
    %v520 = vadd.f32 0.0, %v519
    %v521 = vpop.f32.mrb[0].mxu0
    %522 = vdwg.mxu0
    %v523 = vadd.f32 %v178, %v520
    %v524 = vxor.u32 %v523, 2147483648
    %v525 = vmul.f32 %v524, 1.442695
    %v526 = vpow.pop %v525
    %v527 = vadd.f32 %v526, 1.0
    %v528 = vrcp.pop %v527
    %v529 = vmul.f32 1.0, %v528
    %v530 = vmul.f32 %v529, 2.0
    %v531 = vsub.f32 %v530, 1.0
    %v532 = vsel %vm211, %v531, %v529
    %v534 = vrot.slane %v426, 4
    %v536 = vmul.f32 %v532, %v534
    %538 = vrot.lane.b32.xlu0 %v532, 64
    %v539 = vpop.permute.xlu0 %538
    %v541 = vmul.f32 %v532, %v539
    %543 = vrot.lane.b32.xlu0 %v541, 32
    %v544 = vpop.permute.xlu0 %543
    %v546 = vadd.f32 %v536, %v544
    %v547 = vtanh.pop %v546
    %549 = vrot.lane.b32.xlu0 %v547, 64
    %v550 = vpop.permute.xlu0 %549
    %v552 = vmul.f32 %v532, %v550
    %554 = vrot.lane.b32.xlu0 %v552, 32
    %v555 = vpop.permute.xlu0 %554
    %557 = vst.msk [vmem:[#allocation2 + $0x4] sm:$0x3] %vm317, %v555
    %558 = vrot.lane.b32.xlu0 %v552, 64
    %v559 = vpop.permute.xlu0 %558
    %561 = vst.msk [vmem:[#allocation2 + $0x8] sm:$0xc] %vm322, %v559
    %v562 = vsel %vm324, %v555, %v559
    %v563 = vmul.f32 %v562, %v208
    %v565 = vsel %vm212, %v563, 0
    %567 = vmatprep.subr.mxu0 0.0
    %568 = vmatpush1.msra.mxu0 %v191
    %569 = vmatprep.subr.mxu0 0.0
    %570 = vmatpush1.msra.mxu0 %v192
    %571 = vmatprep.subr.mxu0 0.0
    %572 = vmatpush1.msra.mxu0 %v193
    %573 = vmatprep.subr.mxu0 0.0
    %574 = vmatpush1.msra.mxu0 %v194
    %575 = vmatprep.subr.mxu0 0.0
    %576 = vmatpush1.msra.mxu0 %v195
    %577 = vmatprep.subr.mxu0 0.0
    %578 = vmatpush1.msra.mxu0 %v196
    %579 = vmatprep.subr.mxu0 0.0
    %580 = vmatpush1.msra.mxu0 %v197
    %581 = vmatprep.subr.mxu0 0.0
    %582 = vmatpush1.msra.mxu0 %v198
    %583 = vmatprep.subr.mxu0 0.0
    %584 = vmatpush1.msra.mxu0 0.0
    %585 = vmatprep.subr.mxu0 0.0
    %586 = vmatpush1.msra.mxu0 0.0
    %587 = vmatprep.subr.mxu0 0.0
    %588 = vmatpush1.msra.mxu0 0.0
    %589 = vmatprep.subr.mxu0 0.0
    %590 = vmatpush1.msra.mxu0 0.0
    %591 = vmatprep.subr.mxu0 0.0
    %592 = vmatpush1.msra.mxu0 0.0
    %593 = vmatprep.subr.mxu0 0.0
    %594 = vmatpush1.msra.mxu0 0.0
    %595 = vmatprep.subr.mxu0 0.0
    %596 = vmatpush1.msra.mxu0 0.0
    %597 = vmatprep.subr.mxu0 0.0
    %598 = vmatpush1.msra.mxu0 0.0
    %599 = vmatprep.subr.mxu0 0.0
    %600 = vmatpush1.msra.mxu0 0.0
    %601 = vmatprep.subr.mxu0 0.0
    %602 = vmatpush1.msra.mxu0 0.0
    %603 = vmatprep.subr.mxu0 0.0
    %604 = vmatpush1.msra.mxu0 0.0
    %605 = vmatprep.subr.mxu0 0.0
    %606 = vmatpush1.msra.mxu0 0.0
    %607 = vmatprep.subr.mxu0 0.0
    %608 = vmatpush1.msra.mxu0 0.0
    %609 = vmatprep.subr.mxu0 0.0
    %610 = vmatpush1.msra.mxu0 0.0
    %611 = vmatprep.subr.mxu0 0.0
    %612 = vmatpush1.msra.mxu0 0.0
    %613 = vmatprep.subr.mxu0 0.0
    %614 = vmatpush1.msra.mxu0 0.0
    %615 = vmatprep.subr.mxu0 0.0
    %616 = vmatpush1.msra.mxu0 0.0
    %617 = vmatprep.subr.mxu0 0.0
    %618 = vmatpush1.msra.mxu0 0.0
    %619 = vmatprep.subr.mxu0 0.0
    %620 = vmatpush1.msra.mxu0 0.0
    %621 = vmatprep.subr.mxu0 0.0
    %622 = vmatpush1.msra.mxu0 0.0
    %623 = vmatprep.subr.mxu0 0.0
    %624 = vmatpush1.msra.mxu0 0.0
    %625 = vmatprep.subr.mxu0 0.0
    %626 = vmatpush1.msra.mxu0 0.0
    %627 = vmatprep.subr.mxu0 0.0
    %628 = vmatpush1.msra.mxu0 0.0
    %629 = vmatprep.subr.mxu0 0.0
    %630 = vmatpush1.msra.mxu0 0.0
    %631 = vmatprep.mubr.f32.mxu0 0.0
    %632 = vmatmul.mubr.f32.gmra.mrb[0].mxu0 %v565
    %v633 = vpop.f32.mrb[0].mxu0
    %v634 = vadd.f32 0.0, %v633
    %v635 = vpop.f32.mrb[0].mxu0
    %636 = vdwg.mxu0
    %v638 = vrot.slane %v634, 4
    %v640 = vadd.f32 %v178, %v638
    %v641 = vxor.u32 %v640, 2147483648
    %v642 = vmul.f32 %v641, 1.442695
    %v643 = vpow.pop %v642
    %v644 = vadd.f32 %v643, 1.0
    %v645 = vrcp.pop %v644
    %v646 = vmul.f32 1.0, %v645
    %v647 = vmul.f32 %v646, 2.0
    %v648 = vsub.f32 %v647, 1.0
    %v649 = vsel %vm211, %v648, %v646
    %v651 = vrot.slane %v546, 4
    %v653 = vmul.f32 %v649, %v651
    %655 = vrot.lane.b32.xlu0 %v649, 64
    %v656 = vpop.permute.xlu0 %655
    %v658 = vmul.f32 %v649, %v656
    %660 = vrot.lane.b32.xlu0 %v658, 32
    %v661 = vpop.permute.xlu0 %660
    %v663 = vadd.f32 %v653, %v661
    %v664 = vtanh.pop %v663
    %666 = vrot.lane.b32.xlu0 %v664, 64
    %v667 = vpop.permute.xlu0 %666
    %v669 = vmul.f32 %v649, %v667
    %671 = vrot.lane.b32.xlu0 %v669, 32
    %v672 = vpop.permute.xlu0 %671
    %674 = vst.msk [vmem:[#allocation2 + $0x2] sm:$0x30] %vm437, %v672
    %675 = vrot.lane.b32.xlu0 %v669, 64
    %v676 = vpop.permute.xlu0 %675
    %678 = vst.msk [vmem:[#allocation2 + $0x2] sm:$0xc0] %vm442, %v676
    %v679 = vsel %vm324, %v672, %v676
    %v680 = vmul.f32 %v679, %v446
    %v682 = vrot.slane %v680, 4
    %v683 = vsel %vm212, %v682, 0
    %685 = vmatprep.subr.mxu0 0.0
    %686 = vmatpush1.msra.mxu0 %v191
    %687 = vmatprep.subr.mxu0 0.0
    %688 = vmatpush1.msra.mxu0 %v192
    %689 = vmatprep.subr.mxu0 0.0
    %690 = vmatpush1.msra.mxu0 %v193
    %691 = vmatprep.subr.mxu0 0.0
    %692 = vmatpush1.msra.mxu0 %v194
    %693 = vmatprep.subr.mxu0 0.0
    %694 = vmatpush1.msra.mxu0 %v195
    %695 = vmatprep.subr.mxu0 0.0
    %696 = vmatpush1.msra.mxu0 %v196
    %697 = vmatprep.subr.mxu0 0.0
    %698 = vmatpush1.msra.mxu0 %v197
    %699 = vmatprep.subr.mxu0 0.0
    %700 = vmatpush1.msra.mxu0 %v198
    %701 = vmatprep.subr.mxu0 0.0
    %702 = vmatpush1.msra.mxu0 0.0
    %703 = vmatprep.subr.mxu0 0.0
    %704 = vmatpush1.msra.mxu0 0.0
    %705 = vmatprep.subr.mxu0 0.0
    %706 = vmatpush1.msra.mxu0 0.0
    %707 = vmatprep.subr.mxu0 0.0
    %708 = vmatpush1.msra.mxu0 0.0
    %709 = vmatprep.subr.mxu0 0.0
    %710 = vmatpush1.msra.mxu0 0.0
    %711 = vmatprep.subr.mxu0 0.0
    %712 = vmatpush1.msra.mxu0 0.0
    %713 = vmatprep.subr.mxu0 0.0
    %714 = vmatpush1.msra.mxu0 0.0
    %715 = vmatprep.subr.mxu0 0.0
    %716 = vmatpush1.msra.mxu0 0.0
    %717 = vmatprep.subr.mxu0 0.0
    %718 = vmatpush1.msra.mxu0 0.0
    %719 = vmatprep.subr.mxu0 0.0
    %720 = vmatpush1.msra.mxu0 0.0
    %721 = vmatprep.subr.mxu0 0.0
    %722 = vmatpush1.msra.mxu0 0.0
    %723 = vmatprep.subr.mxu0 0.0
    %724 = vmatpush1.msra.mxu0 0.0
    %725 = vmatprep.subr.mxu0 0.0
    %726 = vmatpush1.msra.mxu0 0.0
    %727 = vmatprep.subr.mxu0 0.0
    %728 = vmatpush1.msra.mxu0 0.0
    %729 = vmatprep.subr.mxu0 0.0
    %730 = vmatpush1.msra.mxu0 0.0
    %731 = vmatprep.subr.mxu0 0.0
    %732 = vmatpush1.msra.mxu0 0.0
    %733 = vmatprep.subr.mxu0 0.0
    %734 = vmatpush1.msra.mxu0 0.0
    %735 = vmatprep.subr.mxu0 0.0
    %736 = vmatpush1.msra.mxu0 0.0
    %737 = vmatprep.subr.mxu0 0.0
    %738 = vmatpush1.msra.mxu0 0.0
    %739 = vmatprep.subr.mxu0 0.0
    %740 = vmatpush1.msra.mxu0 0.0
    %741 = vmatprep.subr.mxu0 0.0
    %742 = vmatpush1.msra.mxu0 0.0
    %743 = vmatprep.subr.mxu0 0.0
    %744 = vmatpush1.msra.mxu0 0.0
    %745 = vmatprep.subr.mxu0 0.0
    %746 = vmatpush1.msra.mxu0 0.0
    %747 = vmatprep.subr.mxu0 0.0
    %748 = vmatpush1.msra.mxu0 0.0
    %749 = vmatprep.mubr.f32.mxu0 0.0
    %750 = vmatmul.mubr.f32.gmra.mrb[0].mxu0 %v683
    %v751 = vpop.f32.mrb[0].mxu0
    %v752 = vadd.f32 0.0, %v751
    %v753 = vpop.f32.mrb[0].mxu0
    %754 = vdwg.mxu0
    %v755 = vadd.f32 %v183, %v752
    %v756 = vxor.u32 %v755, 2147483648
    %v757 = vmul.f32 %v756, 1.442695
    %v758 = vpow.pop %v757
    %v759 = vadd.f32 %v758, 1.0
    %v760 = vrcp.pop %v759
    %v761 = vmul.f32 1.0, %v760
    %v762 = vmul.f32 %v761, 2.0
    %v763 = vsub.f32 %v762, 1.0
    %v764 = vsel %vm211, %v763, %v761
    %v766 = vrot.slane %v663, 4
    %v768 = vmul.f32 %v764, %v766
    %770 = vrot.lane.b32.xlu0 %v764, 64
    %v771 = vpop.permute.xlu0 %770
    %v773 = vmul.f32 %v764, %v771
    %775 = vrot.lane.b32.xlu0 %v773, 32
    %v776 = vpop.permute.xlu0 %775
    %v778 = vadd.f32 %v768, %v776
    %v779 = vtanh.pop %v778
    %781 = vrot.lane.b32.xlu0 %v779, 64
    %v782 = vpop.permute.xlu0 %781
    %v784 = vmul.f32 %v764, %v782
    %786 = vrot.lane.b32.xlu0 %v784, 32
    %v787 = vpop.permute.xlu0 %786
    %789 = vst.msk [vmem:[#allocation2 + $0x8] sm:$0x3] %vm317, %v787
    %790 = vrot.lane.b32.xlu0 %v784, 64
    %v791 = vpop.permute.xlu0 %790
    %793 = vst.msk [vmem:[#allocation2 + $0x4] sm:$0xc] %vm322, %v791
    %v794 = vsel %vm324, %v787, %v791
    %v795 = vmul.f32 %v794, %v208
    %v797 = vsel %vm212, %v795, 0
    %799 = vmatprep.subr.mxu0 0.0
    %800 = vmatpush1.msra.mxu0 %v191
    %801 = vmatprep.subr.mxu0 0.0
    %802 = vmatpush1.msra.mxu0 %v192
    %803 = vmatprep.subr.mxu0 0.0
    %804 = vmatpush1.msra.mxu0 %v193
    %805 = vmatprep.subr.mxu0 0.0
    %806 = vmatpush1.msra.mxu0 %v194
    %807 = vmatprep.subr.mxu0 0.0
    %808 = vmatpush1.msra.mxu0 %v195
    %809 = vmatprep.subr.mxu0 0.0
    %810 = vmatpush1.msra.mxu0 %v196
    %811 = vmatprep.subr.mxu0 0.0
    %812 = vmatpush1.msra.mxu0 %v197
    %813 = vmatprep.subr.mxu0 0.0
    %814 = vmatpush1.msra.mxu0 %v198
    %815 = vmatprep.subr.mxu0 0.0
    %816 = vmatpush1.msra.mxu0 0.0
    %817 = vmatprep.subr.mxu0 0.0
    %818 = vmatpush1.msra.mxu0 0.0
    %819 = vmatprep.subr.mxu0 0.0
    %820 = vmatpush1.msra.mxu0 0.0
    %821 = vmatprep.subr.mxu0 0.0
    %822 = vmatpush1.msra.mxu0 0.0
    %823 = vmatprep.subr.mxu0 0.0
    %824 = vmatpush1.msra.mxu0 0.0
    %825 = vmatprep.subr.mxu0 0.0
    %826 = vmatpush1.msra.mxu0 0.0
    %827 = vmatprep.subr.mxu0 0.0
    %828 = vmatpush1.msra.mxu0 0.0
    %829 = vmatprep.subr.mxu0 0.0
    %830 = vmatpush1.msra.mxu0 0.0
    %831 = vmatprep.subr.mxu0 0.0
    %832 = vmatpush1.msra.mxu0 0.0
    %833 = vmatprep.subr.mxu0 0.0
    %834 = vmatpush1.msra.mxu0 0.0
    %835 = vmatprep.subr.mxu0 0.0
    %836 = vmatpush1.msra.mxu0 0.0
    %837 = vmatprep.subr.mxu0 0.0
    %838 = vmatpush1.msra.mxu0 0.0
    %839 = vmatprep.subr.mxu0 0.0
    %840 = vmatpush1.msra.mxu0 0.0
    %841 = vmatprep.subr.mxu0 0.0
    %842 = vmatpush1.msra.mxu0 0.0
    %843 = vmatprep.subr.mxu0 0.0
    %844 = vmatpush1.msra.mxu0 0.0
    %845 = vmatprep.subr.mxu0 0.0
    %846 = vmatpush1.msra.mxu0 0.0
    %847 = vmatprep.subr.mxu0 0.0
    %848 = vmatpush1.msra.mxu0 0.0
    %849 = vmatprep.subr.mxu0 0.0
    %850 = vmatpush1.msra.mxu0 0.0
    %851 = vmatprep.subr.mxu0 0.0
    %852 = vmatpush1.msra.mxu0 0.0
    %853 = vmatprep.subr.mxu0 0.0
    %854 = vmatpush1.msra.mxu0 0.0
    %855 = vmatprep.subr.mxu0 0.0
    %856 = vmatpush1.msra.mxu0 0.0
    %857 = vmatprep.subr.mxu0 0.0
    %858 = vmatpush1.msra.mxu0 0.0
    %859 = vmatprep.subr.mxu0 0.0
    %860 = vmatpush1.msra.mxu0 0.0
    %861 = vmatprep.subr.mxu0 0.0
    %862 = vmatpush1.msra.mxu0 0.0
    %863 = vmatprep.mubr.f32.mxu0 0.0
    %864 = vmatmul.mubr.f32.gmra.mrb[0].mxu0 %v797
    %v865 = vpop.f32.mrb[0].mxu0
    %v866 = vadd.f32 0.0, %v865
    %v867 = vpop.f32.mrb[0].mxu0
    %868 = vdwg.mxu0
    %v870 = vrot.slane %v866, 4
    %v872 = vadd.f32 %v183, %v870
    %v873 = vxor.u32 %v872, 2147483648
    %v874 = vmul.f32 %v873, 1.442695
    %v875 = vpow.pop %v874
    %v876 = vadd.f32 %v875, 1.0
    %v877 = vrcp.pop %v876
    %v878 = vmul.f32 1.0, %v877
    %v879 = vmul.f32 %v878, 2.0
    %v880 = vsub.f32 %v879, 1.0
    %v881 = vsel %vm211, %v880, %v878
    %v883 = vrot.slane %v778, 4
    %v885 = vmul.f32 %v881, %v883
    %887 = vrot.lane.b32.xlu0 %v881, 64
    %v888 = vpop.permute.xlu0 %887
    %v890 = vmul.f32 %v881, %v888
    %892 = vrot.lane.b32.xlu0 %v890, 32
    %v893 = vpop.permute.xlu0 %892
    %v895 = vadd.f32 %v885, %v893
    %v896 = vtanh.pop %v895
    %898 = vrot.lane.b32.xlu0 %v896, 64
    %v899 = vpop.permute.xlu0 %898
    %v901 = vmul.f32 %v881, %v899
    %903 = vrot.lane.b32.xlu0 %v901, 32
    %v904 = vpop.permute.xlu0 %903
    %906 = vst.msk [vmem:[#allocation2 + $0x6] sm:$0x30] %vm437, %v904
    %907 = vrot.lane.b32.xlu0 %v901, 64
    %v908 = vpop.permute.xlu0 %907
    %910 = vst.msk [vmem:[#allocation2 - $0x2] sm:$0xc0] %vm442, %v908
    %v911 = vsel %vm324, %v904, %v908
    %v912 = vmul.f32 %v911, %v446
    %v914 = vrot.slane %v912, 4
    %v915 = vsel %vm212, %v914, 0
    %917 = vmatprep.subr.mxu0 0.0
    %918 = vmatpush1.msra.mxu0 %v191
    %919 = vmatprep.subr.mxu0 0.0
    %920 = vmatpush1.msra.mxu0 %v192
    %921 = vmatprep.subr.mxu0 0.0
    %922 = vmatpush1.msra.mxu0 %v193
    %923 = vmatprep.subr.mxu0 0.0
    %924 = vmatpush1.msra.mxu0 %v194
    %925 = vmatprep.subr.mxu0 0.0
    %926 = vmatpush1.msra.mxu0 %v195
    %927 = vmatprep.subr.mxu0 0.0
    %928 = vmatpush1.msra.mxu0 %v196
    %929 = vmatprep.subr.mxu0 0.0
    %930 = vmatpush1.msra.mxu0 %v197
    %931 = vmatprep.subr.mxu0 0.0
    %932 = vmatpush1.msra.mxu0 %v198
    %933 = vmatprep.subr.mxu0 0.0
    %934 = vmatpush1.msra.mxu0 0.0
    %935 = vmatprep.subr.mxu0 0.0
    %936 = vmatpush1.msra.mxu0 0.0
    %937 = vmatprep.subr.mxu0 0.0
    %938 = vmatpush1.msra.mxu0 0.0
    %939 = vmatprep.subr.mxu0 0.0
    %940 = vmatpush1.msra.mxu0 0.0
    %941 = vmatprep.subr.mxu0 0.0
    %942 = vmatpush1.msra.mxu0 0.0
    %943 = vmatprep.subr.mxu0 0.0
    %944 = vmatpush1.msra.mxu0 0.0
    %945 = vmatprep.subr.mxu0 0.0
    %946 = vmatpush1.msra.mxu0 0.0
    %947 = vmatprep.subr.mxu0 0.0
    %948 = vmatpush1.msra.mxu0 0.0
    %949 = vmatprep.subr.mxu0 0.0
    %950 = vmatpush1.msra.mxu0 0.0
    %951 = vmatprep.subr.mxu0 0.0
    %952 = vmatpush1.msra.mxu0 0.0
    %953 = vmatprep.subr.mxu0 0.0
    %954 = vmatpush1.msra.mxu0 0.0
    %955 = vmatprep.subr.mxu0 0.0
    %956 = vmatpush1.msra.mxu0 0.0
    %957 = vmatprep.subr.mxu0 0.0
    %958 = vmatpush1.msra.mxu0 0.0
    %959 = vmatprep.subr.mxu0 0.0
    %960 = vmatpush1.msra.mxu0 0.0
    %961 = vmatprep.subr.mxu0 0.0
    %962 = vmatpush1.msra.mxu0 0.0
    %963 = vmatprep.subr.mxu0 0.0
    %964 = vmatpush1.msra.mxu0 0.0
    %965 = vmatprep.subr.mxu0 0.0
    %966 = vmatpush1.msra.mxu0 0.0
    %967 = vmatprep.subr.mxu0 0.0
    %968 = vmatpush1.msra.mxu0 0.0
    %969 = vmatprep.subr.mxu0 0.0
    %970 = vmatpush1.msra.mxu0 0.0
    %971 = vmatprep.subr.mxu0 0.0
    %972 = vmatpush1.msra.mxu0 0.0
    %973 = vmatprep.subr.mxu0 0.0
    %974 = vmatpush1.msra.mxu0 0.0
    %975 = vmatprep.subr.mxu0 0.0
    %976 = vmatpush1.msra.mxu0 0.0
    %977 = vmatprep.subr.mxu0 0.0
    %978 = vmatpush1.msra.mxu0 0.0
    %979 = vmatprep.subr.mxu0 0.0
    %980 = vmatpush1.msra.mxu0 0.0
    %981 = vmatprep.mubr.f32.mxu0 0.0
    %982 = vmatmul.mubr.f32.gmra.mrb[0].mxu0 %v915
    %v983 = vpop.f32.mrb[0].mxu0
    %v984 = vadd.f32 0.0, %v983
    %v985 = vpop.f32.mrb[0].mxu0
    %986 = vdwg.mxu0
    %v987 = vadd.f32 %v188, %v984
    %v988 = vxor.u32 %v987, 2147483648
    %v989 = vmul.f32 %v988, 1.442695
    %v990 = vpow.pop %v989
    %v991 = vadd.f32 %v990, 1.0
    %v992 = vrcp.pop %v991
    %v993 = vmul.f32 1.0, %v992
    %v994 = vmul.f32 %v993, 2.0
    %v995 = vsub.f32 %v994, 1.0
    %v996 = vsel %vm211, %v995, %v993
    %v998 = vrot.slane %v895, 4
    %v1000 = vmul.f32 %v996, %v998
    %1002 = vrot.lane.b32.xlu0 %v996, 64
    %v1003 = vpop.permute.xlu0 %1002
    %v1005 = vmul.f32 %v996, %v1003
    %1007 = vrot.lane.b32.xlu0 %v1005, 32
    %v1008 = vpop.permute.xlu0 %1007
    %v1010 = vadd.f32 %v1000, %v1008
    %v1011 = vtanh.pop %v1010
    %1013 = vrot.lane.b32.xlu0 %v1011, 64
    %v1014 = vpop.permute.xlu0 %1013
    %v1016 = vmul.f32 %v996, %v1014
    %1018 = vrot.lane.b32.xlu0 %v1016, 32
    %v1019 = vpop.permute.xlu0 %1018
    %1021 = vst.msk [vmem:[#allocation2 + $0xc] sm:$0x3] %vm317, %v1019
    %1022 = vrot.lane.b32.xlu0 %v1016, 64
    %v1023 = vpop.permute.xlu0 %1022
    %1025 = vst.msk [vmem:[#allocation2] sm:$0xc] %vm322, %v1023
    %v1026 = vsel %vm324, %v1019, %v1023
    %v1027 = vmul.f32 %v1026, %v208
    %v1029 = vsel %vm212, %v1027, 0
    %1031 = vmatprep.subr.mxu0 0.0
    %1032 = vmatpush1.msra.mxu0 %v191
    %1033 = vmatprep.subr.mxu0 0.0
    %1034 = vmatpush1.msra.mxu0 %v192
    %1035 = vmatprep.subr.mxu0 0.0
    %1036 = vmatpush1.msra.mxu0 %v193
    %1037 = vmatprep.subr.mxu0 0.0
    %1038 = vmatpush1.msra.mxu0 %v194
    %1039 = vmatprep.subr.mxu0 0.0
    %1040 = vmatpush1.msra.mxu0 %v195
    %1041 = vmatprep.subr.mxu0 0.0
    %1042 = vmatpush1.msra.mxu0 %v196
    %1043 = vmatprep.subr.mxu0 0.0
    %1044 = vmatpush1.msra.mxu0 %v197
    %1045 = vmatprep.subr.mxu0 0.0
    %1046 = vmatpush1.msra.mxu0 %v198
    %1047 = vmatprep.subr.mxu0 0.0
    %1048 = vmatpush1.msra.mxu0 0.0
    %1049 = vmatprep.subr.mxu0 0.0
    %1050 = vmatpush1.msra.mxu0 0.0
    %1051 = vmatprep.subr.mxu0 0.0
    %1052 = vmatpush1.msra.mxu0 0.0
    %1053 = vmatprep.subr.mxu0 0.0
    %1054 = vmatpush1.msra.mxu0 0.0
    %1055 = vmatprep.subr.mxu0 0.0
    %1056 = vmatpush1.msra.mxu0 0.0
    %1057 = vmatprep.subr.mxu0 0.0
    %1058 = vmatpush1.msra.mxu0 0.0
    %1059 = vmatprep.subr.mxu0 0.0
    %1060 = vmatpush1.msra.mxu0 0.0
    %1061 = vmatprep.subr.mxu0 0.0
    %1062 = vmatpush1.msra.mxu0 0.0
    %1063 = vmatprep.subr.mxu0 0.0
    %1064 = vmatpush1.msra.mxu0 0.0
    %1065 = vmatprep.subr.mxu0 0.0
    %1066 = vmatpush1.msra.mxu0 0.0
    %1067 = vmatprep.subr.mxu0 0.0
    %1068 = vmatpush1.msra.mxu0 0.0
    %1069 = vmatprep.subr.mxu0 0.0
    %1070 = vmatpush1.msra.mxu0 0.0
    %1071 = vmatprep.subr.mxu0 0.0
    %1072 = vmatpush1.msra.mxu0 0.0
    %1073 = vmatprep.subr.mxu0 0.0
    %1074 = vmatpush1.msra.mxu0 0.0
    %1075 = vmatprep.subr.mxu0 0.0
    %1076 = vmatpush1.msra.mxu0 0.0
    %1077 = vmatprep.subr.mxu0 0.0
    %1078 = vmatpush1.msra.mxu0 0.0
    %1079 = vmatprep.subr.mxu0 0.0
    %1080 = vmatpush1.msra.mxu0 0.0
    %1081 = vmatprep.subr.mxu0 0.0
    %1082 = vmatpush1.msra.mxu0 0.0
    %1083 = vmatprep.subr.mxu0 0.0
    %1084 = vmatpush1.msra.mxu0 0.0
    %1085 = vmatprep.subr.mxu0 0.0
    %1086 = vmatpush1.msra.mxu0 0.0
    %1087 = vmatprep.subr.mxu0 0.0
    %1088 = vmatpush1.msra.mxu0 0.0
    %1089 = vmatprep.subr.mxu0 0.0
    %1090 = vmatpush1.msra.mxu0 0.0
    %1091 = vmatprep.subr.mxu0 0.0
    %1092 = vmatpush1.msra.mxu0 0.0
    %1093 = vmatprep.subr.mxu0 0.0
    %1094 = vmatpush1.msra.mxu0 0.0
    %1095 = vmatprep.mubr.f32.mxu0 0.0
    %1096 = vmatmul.mubr.f32.gmra.mrb[0].mxu0 %v1029
    %v1097 = vpop.f32.mrb[0].mxu0
    %v1098 = vadd.f32 0.0, %v1097
    %v1099 = vpop.f32.mrb[0].mxu0
    %1100 = vdwg.mxu0
    %v1102 = vrot.slane %v1098, 4
    %v1104 = vadd.f32 %v188, %v1102
    %v1105 = vxor.u32 %v1104, 2147483648
    %v1106 = vmul.f32 %v1105, 1.442695
    %v1107 = vpow.pop %v1106
    %v1108 = vadd.f32 %v1107, 1.0
    %v1109 = vrcp.pop %v1108
    %v1110 = vmul.f32 1.0, %v1109
    %v1111 = vmul.f32 %v1110, 2.0
    %v1112 = vsub.f32 %v1111, 1.0
    %v1113 = vsel %vm211, %v1112, %v1110
    %v1115 = vrot.slane %v1010, 4
    %v1117 = vmul.f32 %v1113, %v1115
    %1119 = vrot.lane.b32.xlu0 %v1113, 64
    %v1120 = vpop.permute.xlu0 %1119
    %v1122 = vmul.f32 %v1113, %v1120
    %1124 = vrot.lane.b32.xlu0 %v1122, 32
    %v1125 = vpop.permute.xlu0 %1124
    %v1127 = vadd.f32 %v1117, %v1125
    %v1128 = vtanh.pop %v1127
    %1130 = vrot.lane.b32.xlu0 %v1128, 64
    %v1131 = vpop.permute.xlu0 %1130
    %v1133 = vmul.f32 %v1113, %v1131
    %1135 = vrot.lane.b32.xlu0 %v1133, 32
    %v1136 = vpop.permute.xlu0 %1135
    %1138 = vst.msk [vmem:[#allocation2 + $0xa] sm:$0x30] %vm437, %v1136
    %1139 = vrot.lane.b32.xlu0 %v1133, 64
    %v1140 = vpop.permute.xlu0 %1139
    %1142 = vst.msk [vmem:[#allocation2 - $0x6] sm:$0xc0] %vm442, %v1140
    %v1143 = vld [vmem:[#allocation2] sm:$0xff]
    %v1144 = vld [vmem:[#allocation2 + $0x8] sm:$0xff]
    %v1145 = vld [vmem:[#allocation9] sm:$0xff]
    %v1146 = vld [vmem:[#allocation9 + $0x8] sm:$0xff]
    %v1147 = vld [vmem:[#allocation9 + $0x10] sm:$0xff]
    %v1148 = vld [vmem:[#allocation9 + $0x18] sm:$0xff]
    %v1149 = vld [vmem:[#allocation9 + $0x20] sm:$0xff]
    %v1150 = vld [vmem:[#allocation9 + $0x28] sm:$0xff]
    %v1151 = vld [vmem:[#allocation9 + $0x30] sm:$0xff]
    %v1152 = vld [vmem:[#allocation9 + $0x38] sm:$0xff]
    %v1153 = vld [vmem:[%s4] sm:$0x1]
    %v1155 = vlaneseq
    %v1156 = vshrl.u32 %v1155, 7
    %v1157 = vsub.s32 0, %v1156
    %v1158 = vrot.slane %v1153, %v1157
    %v1161 = vsel %vm212, %v1143, 0
    %v1164 = vsel %vm212, %v1144, 0
    %1166 = vmatprep.subr.mxu0 0.0
    %1167 = vmatpush1.msra.mxu0 %v1145
    %1168 = vmatprep.subr.mxu0 0.0
    %1169 = vmatpush1.msra.mxu0 %v1146
    %1170 = vmatprep.subr.mxu0 0.0
    %1171 = vmatpush1.msra.mxu0 %v1147
    %1172 = vmatprep.subr.mxu0 0.0
    %1173 = vmatpush1.msra.mxu0 %v1148
    %1174 = vmatprep.subr.mxu0 0.0
    %1175 = vmatpush1.msra.mxu0 %v1149
    %1176 = vmatprep.subr.mxu0 0.0
    %1177 = vmatpush1.msra.mxu0 %v1150
    %1178 = vmatprep.subr.mxu0 0.0
    %1179 = vmatpush1.msra.mxu0 %v1151
    %1180 = vmatprep.subr.mxu0 0.0
    %1181 = vmatpush1.msra.mxu0 %v1152
    %1182 = vmatprep.subr.mxu0 0.0
    %1183 = vmatpush1.msra.mxu0 0.0
    %1184 = vmatprep.subr.mxu0 0.0
    %1185 = vmatpush1.msra.mxu0 0.0
    %1186 = vmatprep.subr.mxu0 0.0
    %1187 = vmatpush1.msra.mxu0 0.0
    %1188 = vmatprep.subr.mxu0 0.0
    %1189 = vmatpush1.msra.mxu0 0.0
    %1190 = vmatprep.subr.mxu0 0.0
    %1191 = vmatpush1.msra.mxu0 0.0
    %1192 = vmatprep.subr.mxu0 0.0
    %1193 = vmatpush1.msra.mxu0 0.0
    %1194 = vmatprep.subr.mxu0 0.0
    %1195 = vmatpush1.msra.mxu0 0.0
    %1196 = vmatprep.subr.mxu0 0.0
    %1197 = vmatpush1.msra.mxu0 0.0
    %1198 = vmatprep.subr.mxu0 0.0
    %1199 = vmatpush1.msra.mxu0 0.0
    %1200 = vmatprep.subr.mxu0 0.0
    %1201 = vmatpush1.msra.mxu0 0.0
    %1202 = vmatprep.subr.mxu0 0.0
    %1203 = vmatpush1.msra.mxu0 0.0
    %1204 = vmatprep.subr.mxu0 0.0
    %1205 = vmatpush1.msra.mxu0 0.0
    %1206 = vmatprep.subr.mxu0 0.0
    %1207 = vmatpush1.msra.mxu0 0.0
    %1208 = vmatprep.subr.mxu0 0.0
    %1209 = vmatpush1.msra.mxu0 0.0
    %1210 = vmatprep.subr.mxu0 0.0
    %1211 = vmatpush1.msra.mxu0 0.0
    %1212 = vmatprep.subr.mxu0 0.0
    %1213 = vmatpush1.msra.mxu0 0.0
    %1214 = vmatprep.subr.mxu0 0.0
    %1215 = vmatpush1.msra.mxu0 0.0
    %1216 = vmatprep.subr.mxu0 0.0
    %1217 = vmatpush1.msra.mxu0 0.0
    %1218 = vmatprep.subr.mxu0 0.0
    %1219 = vmatpush1.msra.mxu0 0.0
    %1220 = vmatprep.subr.mxu0 0.0
    %1221 = vmatpush1.msra.mxu0 0.0
    %1222 = vmatprep.subr.mxu0 0.0
    %1223 = vmatpush1.msra.mxu0 0.0
    %1224 = vmatprep.subr.mxu0 0.0
    %1225 = vmatpush1.msra.mxu0 0.0
    %1226 = vmatprep.subr.mxu0 0.0
    %1227 = vmatpush1.msra.mxu0 0.0
    %1228 = vmatprep.subr.mxu0 0.0
    %1229 = vmatpush1.msra.mxu0 0.0
    %1230 = vmatprep.mubr.f32.mxu0 0.0
    %1231 = vmatmul.mubr.f32.gmra.mrb[0].mxu0 %v1161
    %v1232 = vpop.f32.mrb[0].mxu0
    %v1233 = vadd.f32 %v1158, %v1232
    %v1234 = vpop.f32.mrb[0].mxu0
    %1235 = vmatprep.mubr.f32.mxu0 0.0
    %1236 = vmatmul.mubr.f32.gmra.mrb[0].mxu0 %v1164
    %v1237 = vpop.f32.mrb[0].mxu0
    %v1238 = vadd.f32 %v1158, %v1237
    %v1239 = vpop.f32.mrb[0].mxu0
    %1240 = vdwg.mxu0
    %1241 = vst [vmem:[#allocation11] sm:$0xff] %v1233
    %1242 = vst [vmem:[#allocation11 + $0x8] sm:$0xff] %v1238
    // Predicated region
    $region38: #{tpu_custom_call.1} parent=1 // pred_check
      _
    $region39: #{tpu_custom_call.1} parent=1 // pred_check_branch
      %1244 = sbr.rel (0) target = $region41
    $region40: #{tpu_custom_call.1} parent=1 // pred_region
      %s1246 = ssub.s32 256, 256
      %1247 = vsyncadd [#allocation5], %s1246
      %s1248 = sshll.u32 [#allocation11], 4
      %s1249 = int_to_ptr.vmem [resolvable:$true] %s1248
      %1254 = dma.vmem_to_hbm [thread:$0]  %s1249, 256, %s5, [#allocation5], 128, 128, 8
    $region41: #{tpu_custom_call.1} parent=1 // pred_fallthru
      _
    // Predicated region
    $region42: #{tpu_custom_call.1} parent=1 // pred_check
      _
    $region43: #{tpu_custom_call.1} parent=1 // pred_check_branch
      %1256 = sbr.rel (0) target = $region45
    $region44: #{tpu_custom_call.1} parent=1 // pred_region
      %1257 = dma.done [#allocation5], 256
    $region45: #{tpu_custom_call.1} parent=1 // pred_fallthru
      _
    %1258 = vsyncpa [#allocation4], 1
    %1259 = vsyncpa [#allocation7], 1
    %1260 = vsyncpa [#allocation10], 1
    %1261 = vsyncpa [#allocation5], 1

</llo_original>
